<compile_context>
chip_gen: v7x
topology: tpu7x:2x2x1
jax: 0.10.0
libtpu: 0.0.40
codegen_flags: <defaults>
</compile_context>

<pallas_src>
import functools

import jax
import jax.numpy as jnp
import numpy as np
from jax import lax
from jax.experimental import pallas as pl
from jax.experimental.pallas import tpu as pltpu

_EPS = 1e-5


# ----------------------------- Pallas kernels ------------------------------ #

def _upconv_kernel(x_ref, w_ref, b_ref, o_ref):
    # (Cout*4, Cin) @ (Cin, M) + bias -> (Cout*4, M); M = N*H*W is lane-dense.
    o_ref[...] = (
        jnp.dot(w_ref[...], x_ref[...], preferred_element_type=jnp.float32)
        + b_ref[...]
    )


def upconv_matmul_bias(x_slab, w_mat, b_col):
    O, _ = w_mat.shape
    _, M = x_slab.shape
    return pl.pallas_call(
        _upconv_kernel,
        out_shape=jax.ShapeDtypeStruct((O, M), jnp.float32),
    )(x_slab, w_mat, b_col)


def _stage_taps(stage_ref, masks, slabs, W, M):
    """Write the (9*Cin_total, M) im2col slab for a 3x3 / pad=1 conv.

    Rows are ordered (tap, slab, channel), tap = (dh+1)*3 + (dw+1), matching
    the (cout, 9*Cin_total) weight layout built in prepare_params.  Each tap
    is a static lane-offset slice of the input slab (no roll: the wrapped tail
    columns are always invalid positions and keep the zero the scratch was
    memset to), multiplied once per tap by the shared per-column zero-padding
    mask; the all-valid center tap skips the mask entirely.
    """
    cin_tot = sum(x.shape[0] for x in slabs)
    for dh in (-1, 0, 1):
        for dw in (-1, 0, 1):
            tap = (dh + 1) * 3 + (dw + 1)
            off = dh * W + dw
            row = tap * cin_tot
            for x in slabs:
                c = x.shape[0]
                if off == 0:
                    stage_ref[row:row + c, :] = x          # center tap: no mask
                elif off > 0:
                    stage_ref[row:row + c, 0:M - off] = (
                        x[:, off:M] * masks[tap:tap + 1, 0:M - off])
                else:
                    a = -off
                    stage_ref[row:row + c, a:M] = (
                        x[:, 0:M - a] * masks[tap:tap + 1, a:M])
                row += c


def _conv_bn(w_ref, stage_ref, g_ref, be_ref):
    # One deep-K MXU matmul per conv layer (K = 9*Cin_total), then
    # training-mode BatchNorm with batch stats over all N*H*W lanes (exact:
    # the whole M lives in this single invocation).  The conv bias is dropped:
    # it cancels exactly in (y - mean).
    y = jnp.dot(w_ref[...], stage_ref[...], preferred_element_type=jnp.float32)
    mean = jnp.mean(y, axis=1, keepdims=True)
    var = jnp.mean((y - mean) ** 2, axis=1, keepdims=True)
    # TODO(synk): when M is tiled for real UNet resolutions, switch to
    # sum / sum-of-squares partials accumulated in (cout, 1) VMEM scratch
    # across the M grid axis, with a second normalize sweep.
    return (y - mean) * lax.rsqrt(var + _EPS) * g_ref[...] + be_ref[...]


def _res_conv_block_kernel(up_ref, br_ref, m_ref,
                           w1_ref, w2_ref, w3_ref,
                           g1_ref, be1_ref, g2_ref, be2_ref, g3_ref, be3_ref,
                           o_ref, stage1_ref, stage2_ref, *, W):
    """UNetResConvBlock fused into ONE kernel.

    conv1(+BN+ReLU) -> conv2(+BN+ReLU) -> conv3(+BN) + h1 residual -> ReLU.
    h1/h2/residual never touch HBM, the [up, bridge] channel concat is folded
    into conv1's staging, and each conv is a single (cout, 9*Cin) x (9*Cin, M)
    MXU matmul.
    """
    M = up_ref.shape[1]
    masks = m_ref[...]                      # (9, M) zero-padding masks, shared

    # Zero the im2col scratches once: wrapped tail columns of every shifted
    # tap are always masked-out positions and simply stay zero.
    stage1_ref[...] = jnp.zeros(stage1_ref.shape, jnp.float32)
    stage2_ref[...] = jnp.zeros(stage2_ref.shape, jnp.float32)

    # conv1: channel concat folded — two input slabs share each tap's mask.
    _stage_taps(stage1_ref, masks, [up_ref[...], br_ref[...]], W, M)
    h1 = jnp.maximum(_conv_bn(w1_ref, stage1_ref, g1_ref, be1_ref), 0.0)

    # conv2
    _stage_taps(stage2_ref, masks, [h1], W, M)
    h2 = jnp.maximum(_conv_bn(w2_ref, stage2_ref, g2_ref, be2_ref), 0.0)

    # conv3 + residual + ReLU (stage2 reused: same taps -> same zero tails)
    _stage_taps(stage2_ref, masks, [h2], W, M)
    h3 = _conv_bn(w3_ref, stage2_ref, g3_ref, be3_ref) + h1
    o_ref[...] = jnp.maximum(h3, 0.0)


def res_conv_block(up_slab, crop_slab, masks, pp, W):
    cout = pp["g1"].shape[0]
    cin1 = up_slab.shape[0] + crop_slab.shape[0]
    M = up_slab.shape[1]
    kernel = functools.partial(_res_conv_block_kernel, W=W)
    # TODO(synk): at real UNet resolutions this single-shot call must get an
    # M-tiled grid (lane-dense 512-1024 column tiles, halo handling, cross-tile
    # sum/sumsq BN), a leading >=2-step "parallel" axis for v7x's second core,
    # and pltpu.CompilerParams(vmem_limit_bytes=...) budgeted for 64 MiB on
    # v7x / 128 MiB on v5e/v6e; at these shapes every operand is a few KB so a
    # single resident block is fastest.
    return pl.pallas_call(
        kernel,
        out_shape=jax.ShapeDtypeStruct((cout, M), jnp.float32),
        scratch_shapes=[pltpu.VMEM((9 * cin1, M), jnp.float32),
                        pltpu.VMEM((9 * cout, M), jnp.float32)],
    )(up_slab, crop_slab, masks,
      pp["w1"], pp["w2"], pp["w3"],
      pp["g1"], pp["be1"], pp["g2"], pp["be2"], pp["g3"], pp["be3"])


# ------------------------- parameter / mask prep ---------------------------- #

def prepare_params(p):
    """Hoist all weight re-layouts / casts out of the jitted forward."""
    f32 = jnp.float32

    def wide(w):  # (Cout, Cin, 3, 3) -> (Cout, 9*Cin), K ordered (tap, cin)
        o, c = w.shape[0], w.shape[1]
        return jnp.transpose(w, (0, 2, 3, 1)).reshape(o, 9 * c).astype(f32)

    def col(v):
        return v.reshape(-1, 1).astype(f32)

    cout = p["up_w"].shape[1]
    return {
        # ConvTranspose2d weight (Cin, Cout, 2, 2) -> ((co,kh,kw), ci)
        "up_w": jnp.transpose(p["up_w"], (1, 2, 3, 0)).reshape(cout * 4, -1).astype(f32),
        "up_b": jnp.repeat(p["up_b"], 4).reshape(-1, 1).astype(f32),
        # conv weights as single deep-K matrices; conv biases b1/b2/b3 dropped
        # (they cancel exactly under training-mode BatchNorm).
        "w1": wide(p["w1"]), "w2": wide(p["w2"]), "w3": wide(p["w3"]),
        "g1": col(p["g1"]), "be1": col(p["be1"]),
        "g2": col(p["g2"]), "be2": col(p["be2"]),
        "g3": col(p["g3"]), "be3": col(p["be3"]),
    }


def _make_pad_masks(N, H, W):
    """(9, N*H*W) zero-padding masks, one per 3x3 tap; trace-time constant."""
    hh, ww = np.meshgrid(np.arange(H), np.arange(W), indexing="ij")
    m = np.zeros((9, N * H * W), np.float32)
    for dh in (-1, 0, 1):
        for dw in (-1, 0, 1):
            tap = (dh + 1) * 3 + (dw + 1)
            valid = ((hh + dh >= 0) & (hh + dh < H) &
                     (ww + dw >= 0) & (ww + dw < W))
            m[tap] = np.tile(valid.reshape(-1).astype(np.float32), N)
    return m


# ------------------------------- forward ------------------------------------ #

def unet_up_block_forward(pp, x_nchw, bridge_nchw):
    N, Cin, H, W = x_nchw.shape
    Hu, Wu = 2 * H, 2 * W
    cout = pp["g1"].shape[0]

    # NCHW -> (C, N*H*W) slab (lane-dense): only layout change on the input side.
    x_slab = jnp.transpose(x_nchw, (1, 0, 2, 3)).reshape(Cin, N * H * W)

    # ---- up = ConvTranspose2d(Cin, Cout, k=2, s=2): fused matmul + bias ----
    up4 = upconv_matmul_bias(x_slab, pp["up_w"], pp["up_b"])   # (Cout*4, N*H*W)
    # TODO(synk): at real resolutions, emit the upconv output directly in
    # pixel-shuffled order from the kernel (grid over the 4 (kh,kw) phases with
    # a strided output DMA) instead of this KB-sized XLA reshape/transpose glue.
    up_slab = (up4.reshape(cout, 2, 2, N, H, W)
               .transpose(0, 3, 4, 1, 5, 2)
               .reshape(cout, N * Hu * Wu))

    # ---- center_crop(bridge) -> slab (concat folded into conv1 staging) ----
    _, Cb, Hb, Wb = bridge_nchw.shape
    dy, dx = (Hb - Hu) // 2, (Wb - Wu) // 2
    crop = bridge_nchw[:, :, dy:dy + Hu, dx:dx + Wu]
    # TODO(synk): in the full SiameseNetwork, keep the down-path activations in
    # slab (C, N*H*W) layout so this NCHW->slab transpose never exists.
    crop_slab = jnp.transpose(crop, (1, 0, 2, 3)).reshape(Cb, N * Hu * Wu)

    # Per-tap zero-padding masks: built with numpy at trace time (pure shape
    # function -> baked-in constant), shared by all three convs in the kernel.
    masks = jnp.asarray(_make_pad_masks(N, Hu, Wu))

    # ---- UNetResConvBlock: ONE fused kernel (conv1/2/3 + BN + res + ReLU) ----
    h3 = res_conv_block(up_slab, crop_slab, masks, pp, Wu)

    # slab -> NCHW only at the block output.
    return jnp.transpose(h3.reshape(cout, N, Hu, Wu), (1, 0, 2, 3))


# --------------------------- pure-JAX reference ----------------------------- #

def _ref_conv3x3(x, w, b):
    y = lax.conv_general_dilated(x, w, (1, 1), ((1, 1), (1, 1)),
                                 dimension_numbers=("NCHW", "OIHW", "NCHW"))
    return y + b[None, :, None, None]


def _ref_bn(x, g, be):
    mean = jnp.mean(x, axis=(0, 2, 3), keepdims=True)
    var = jnp.mean((x - mean) ** 2, axis=(0, 2, 3), keepdims=True)
    return ((x - mean) * lax.rsqrt(var + _EPS) * g[None, :, None, None]
            + be[None, :, None, None])


def ref_forward(p, x, bridge):
    N, Cin, H, W = x.shape
    Cout = p["up_w"].shape[1]
    up = jnp.einsum("nihw,iojk->nohjwk", x, p["up_w"]).reshape(N, Cout, 2 * H, 2 * W)
    up = up + p["up_b"][None, :, None, None]
    Hu, Wu = 2 * H, 2 * W
    _, Cb, Hb, Wb = bridge.shape
    dy, dx = (Hb - Hu) // 2, (Wb - Wu) // 2
    cat = jnp.concatenate([up, bridge[:, :, dy:dy + Hu, dx:dx + Wu]], axis=1)
    h1 = jax.nn.relu(_ref_bn(_ref_conv3x3(cat, p["w1"], p["b1"]), p["g1"], p["be1"]))
    h2 = jax.nn.relu(_ref_bn(_ref_conv3x3(h1, p["w2"], p["b2"]), p["g2"], p["be2"]))
    h3 = _ref_bn(_ref_conv3x3(h2, p["w3"], p["b3"]), p["g3"], p["be3"]) + h1
    return jax.nn.relu(h3)


# --------------------------------- main ------------------------------------- #

if __name__ == "__main__":
    key = jax.random.PRNGKey(0)
    keys = jax.random.split(key, 16)

    N = 2
    in_size, out_size = 8, 4      # UNetUpBlock(8, 4, 'upconv', padding=True, batch_norm=True)
    H = W = 8                     # x spatial; up -> 16x16
    Hb = Wb = 20                  # bridge spatial, center-cropped to 16x16
    Cb = in_size - out_size       # bridge channels so concat has in_size channels

    params = {
        "up_w": 0.1 * jax.random.normal(keys[0], (in_size, out_size, 2, 2), jnp.float32),
        "up_b": 0.1 * jax.random.normal(keys[1], (out_size,), jnp.float32),
        "w1": 0.1 * jax.random.normal(keys[2], (out_size, in_size, 3, 3), jnp.float32),
        "b1": 0.1 * jax.random.normal(keys[3], (out_size,), jnp.float32),
        "g1": 1.0 + 0.1 * jax.random.normal(keys[4], (out_size,), jnp.float32),
        "be1": 0.1 * jax.random.normal(keys[5], (out_size,), jnp.float32),
        "w2": 0.1 * jax.random.normal(keys[6], (out_size, out_size, 3, 3), jnp.float32),
        "b2": 0.1 * jax.random.normal(keys[7], (out_size,), jnp.float32),
        "g2": 1.0 + 0.1 * jax.random.normal(keys[8], (out_size,), jnp.float32),
        "be2": 0.1 * jax.random.normal(keys[9], (out_size,), jnp.float32),
        "w3": 0.1 * jax.random.normal(keys[10], (out_size, out_size, 3, 3), jnp.float32),
        "b3": 0.1 * jax.random.normal(keys[11], (out_size,), jnp.float32),
        "g3": 1.0 + 0.1 * jax.random.normal(keys[12], (out_size,), jnp.float32),
        "be3": 0.1 * jax.random.normal(keys[13], (out_size,), jnp.float32),
    }

    x = jax.random.normal(keys[14], (N, in_size, H, W), jnp.float32)
    bridge = jax.random.normal(keys[15], (N, Cb, Hb, Wb), jnp.float32)

    pp = prepare_params(params)                 # all re-layouts hoisted out of jit
    fwd = jax.jit(unet_up_block_forward)

    out = jax.block_until_ready(fwd(pp, x, bridge))
    assert out.shape == (N, out_size, 2 * H, 2 * W), out.shape

    ref = jax.block_until_ready(ref_forward(params, x, bridge))
    np.testing.assert_allclose(np.asarray(out), np.asarray(ref), rtol=1e-3, atol=1e-4)

    print("KERNEL_OK")
</pallas_src>

<mosaic_0001>
module attributes {stable_mosaic.version = 11 : i64} {
  func.func @_upconv_kernel(%arg0: memref<8x128xf32, #tpu.memory_space<vmem>>, %arg1: memref<16x8xf32, #tpu.memory_space<vmem>>, %arg2: memref<16x1xf32, #tpu.memory_space<vmem>>, %arg3: memref<16x128xf32, #tpu.memory_space<vmem>>) attributes {dimension_semantics = [], scalar_prefetch = 0 : i64, scratch_operands = 0 : i64, tpu.core_type = #tpu.core_type<tc>} {
    %c0 = arith.constant 0 : index
    %c0_0 = arith.constant 0 : index
    %0 = vector.load %arg1[%c0, %c0_0] : memref<16x8xf32, #tpu.memory_space<vmem>>, vector<16x8xf32>
    %c0_1 = arith.constant 0 : index
    %c0_2 = arith.constant 0 : index
    %1 = vector.load %arg0[%c0_1, %c0_2] : memref<8x128xf32, #tpu.memory_space<vmem>>, vector<8x128xf32>
    %cst = arith.constant dense<0.000000e+00> : vector<16x128xf32>
    %2 = tpu.matmul %0, %1, %cst {dimension_numbers = #tpu.dot_dimension_numbers<[1], [0], [0], [1], [0, 0, 1, 1], [], []>} : vector<16x8xf32>, vector<8x128xf32>, vector<16x128xf32> -> vector<16x128xf32>
    %c0_3 = arith.constant 0 : index
    %c0_4 = arith.constant 0 : index
    %3 = vector.load %arg2[%c0_3, %c0_4] : memref<16x1xf32, #tpu.memory_space<vmem>>, vector<16x1xf32>
    %4 = vector.broadcast %3 : vector<16x1xf32> to vector<16x128xf32>
    %5 = arith.addf %2, %4 : vector<16x128xf32>
    %c0_5 = arith.constant 0 : index
    %c0_6 = arith.constant 0 : index
    %6 = vector.load %arg3[%c0_5, %c0_6] : memref<16x128xf32, #tpu.memory_space<vmem>>, vector<16x128xf32>
    tpu.vector_store %arg3[%c0_5, %c0_6], %5 {strides = array<i32>} : memref<16x128xf32, #tpu.memory_space<vmem>>, vector<16x128xf32>,
    return
  }
}

module attributes {stable_mosaic.version = 11 : i64} {
  func.func @_res_conv_block_kernel(%arg0: memref<4x512xf32, #tpu.memory_space<vmem>>, %arg1: memref<4x512xf32, #tpu.memory_space<vmem>>, %arg2: memref<9x512xf32, #tpu.memory_space<vmem>>, %arg3: memref<4x72xf32, #tpu.memory_space<vmem>>, %arg4: memref<4x36xf32, #tpu.memory_space<vmem>>, %arg5: memref<4x36xf32, #tpu.memory_space<vmem>>, %arg6: memref<4x1xf32, #tpu.memory_space<vmem>>, %arg7: memref<4x1xf32, #tpu.memory_space<vmem>>, %arg8: memref<4x1xf32, #tpu.memory_space<vmem>>, %arg9: memref<4x1xf32, #tpu.memory_space<vmem>>, %arg10: memref<4x1xf32, #tpu.memory_space<vmem>>, %arg11: memref<4x1xf32, #tpu.memory_space<vmem>>, %arg12: memref<4x512xf32, #tpu.memory_space<vmem>>, %arg13: memref<72x512xf32, #tpu.memory_space<vmem>>, %arg14: memref<36x512xf32, #tpu.memory_space<vmem>>) attributes {dimension_semantics = [], scalar_prefetch = 0 : i64, scratch_operands = 2 : i64, tpu.core_type = #tpu.core_type<tc>} {
    %c0 = arith.constant 0 : index
    %c0_0 = arith.constant 0 : index
    %0 = vector.load %arg2[%c0, %c0_0] : memref<9x512xf32, #tpu.memory_space<vmem>>, vector<9x512xf32>
    %cst = arith.constant 0.000000e+00 : f32
    %1 = vector.broadcast %cst : f32 to vector<72x512xf32>
    %c0_1 = arith.constant 0 : index
    %c0_2 = arith.constant 0 : index
    %2 = vector.load %arg13[%c0_1, %c0_2] : memref<72x512xf32, #tpu.memory_space<vmem>>, vector<72x512xf32>
    tpu.vector_store %arg13[%c0_1, %c0_2], %1 {strides = array<i32>} : memref<72x512xf32, #tpu.memory_space<vmem>>, vector<72x512xf32>,
    %cst_3 = arith.constant 0.000000e+00 : f32
    %3 = vector.broadcast %cst_3 : f32 to vector<36x512xf32>
    %c0_4 = arith.constant 0 : index
    %c0_5 = arith.constant 0 : index
    %4 = vector.load %arg14[%c0_4, %c0_5] : memref<36x512xf32, #tpu.memory_space<vmem>>, vector<36x512xf32>
    tpu.vector_store %arg14[%c0_4, %c0_5], %3 {strides = array<i32>} : memref<36x512xf32, #tpu.memory_space<vmem>>, vector<36x512xf32>,
    %c0_6 = arith.constant 0 : index
    %c0_7 = arith.constant 0 : index
    %5 = vector.load %arg0[%c0_6, %c0_7] : memref<4x512xf32, #tpu.memory_space<vmem>>, vector<4x512xf32>
    %c0_8 = arith.constant 0 : index
    %c0_9 = arith.constant 0 : index
    %6 = vector.load %arg1[%c0_8, %c0_9] : memref<4x512xf32, #tpu.memory_space<vmem>>, vector<4x512xf32>
    %7 = vector.extract_strided_slice %5 {offsets = [0, 0], sizes = [4, 495], strides = [1, 1]} : vector<4x512xf32> to vector<4x495xf32>
    %8 = vector.extract_strided_slice %0 {offsets = [0, 17], sizes = [1, 495], strides = [1, 1]} : vector<9x512xf32> to vector<1x495xf32>
    %9 = vector.broadcast %8 : vector<1x495xf32> to vector<4x495xf32>
    %10 = arith.mulf %7, %9 : vector<4x495xf32>
    %c0_10 = arith.constant 0 : index
    %c17 = arith.constant 17 : index
    %11 = vector.load %arg13[%c0_10, %c17] : memref<72x512xf32, #tpu.memory_space<vmem>>, vector<4x495xf32>
    tpu.vector_store %arg13[%c0_10, %c17], %10 {strides = array<i32>} : memref<72x512xf32, #tpu.memory_space<vmem>>, vector<4x495xf32>,
    %12 = vector.extract_strided_slice %6 {offsets = [0, 0], sizes = [4, 495], strides = [1, 1]} : vector<4x512xf32> to vector<4x495xf32>
    %13 = vector.extract_strided_slice %0 {offsets = [0, 17], sizes = [1, 495], strides = [1, 1]} : vector<9x512xf32> to vector<1x495xf32>
    %14 = vector.broadcast %13 : vector<1x495xf32> to vector<4x495xf32>
    %15 = arith.mulf %12, %14 : vector<4x495xf32>
    %c4 = arith.constant 4 : index
    %c17_11 = arith.constant 17 : index
    %16 = vector.load %arg13[%c4, %c17_11] : memref<72x512xf32, #tpu.memory_space<vmem>>, vector<4x495xf32>
    tpu.vector_store %arg13[%c4, %c17_11], %15 {strides = array<i32>} : memref<72x512xf32, #tpu.memory_space<vmem>>, vector<4x495xf32>,
    %17 = vector.extract_strided_slice %5 {offsets = [0, 0], sizes = [4, 496], strides = [1, 1]} : vector<4x512xf32> to vector<4x496xf32>
    %18 = vector.extract_strided_slice %0 {offsets = [1, 16], sizes = [1, 496], strides = [1, 1]} : vector<9x512xf32> to vector<1x496xf32>
    %19 = vector.broadcast %18 : vector<1x496xf32> to vector<4x496xf32>
    %20 = arith.mulf %17, %19 : vector<4x496xf32>
    %c8 = arith.constant 8 : index
    %c16 = arith.constant 16 : index
    %21 = vector.load %arg13[%c8, %c16] : memref<72x512xf32, #tpu.memory_space<vmem>>, vector<4x496xf32>
    tpu.vector_store %arg13[%c8, %c16], %20 {strides = array<i32>} : memref<72x512xf32, #tpu.memory_space<vmem>>, vector<4x496xf32>,
    %22 = vector.extract_strided_slice %6 {offsets = [0, 0], sizes = [4, 496], strides = [1, 1]} : vector<4x512xf32> to vector<4x496xf32>
    %23 = vector.extract_strided_slice %0 {offsets = [1, 16], sizes = [1, 496], strides = [1, 1]} : vector<9x512xf32> to vector<1x496xf32>
    %24 = vector.broadcast %23 : vector<1x496xf32> to vector<4x496xf32>
    %25 = arith.mulf %22, %24 : vector<4x496xf32>
    %c12 = arith.constant 12 : index
    %c16_12 = arith.constant 16 : index
    %26 = vector.load %arg13[%c12, %c16_12] : memref<72x512xf32, #tpu.memory_space<vmem>>, vector<4x496xf32>
    tpu.vector_store %arg13[%c12, %c16_12], %25 {strides = array<i32>} : memref<72x512xf32, #tpu.memory_space<vmem>>, vector<4x496xf32>,
    %27 = vector.extract_strided_slice %5 {offsets = [0, 0], sizes = [4, 497], strides = [1, 1]} : vector<4x512xf32> to vector<4x497xf32>
    %28 = vector.extract_strided_slice %0 {offsets = [2, 15], sizes = [1, 497], strides = [1, 1]} : vector<9x512xf32> to vector<1x497xf32>
    %29 = vector.broadcast %28 : vector<1x497xf32> to vector<4x497xf32>
    %30 = arith.mulf %27, %29 : vector<4x497xf32>
    %c16_13 = arith.constant 16 : index
    %c15 = arith.constant 15 : index
    %31 = vector.load %arg13[%c16_13, %c15] : memref<72x512xf32, #tpu.memory_space<vmem>>, vector<4x497xf32>
    tpu.vector_store %arg13[%c16_13, %c15], %30 {strides = array<i32>} : memref<72x512xf32, #tpu.memory_space<vmem>>, vector<4x497xf32>,
    %32 = vector.extract_strided_slice %6 {offsets = [0, 0], sizes = [4, 497], strides = [1, 1]} : vector<4x512xf32> to vector<4x497xf32>
    %33 = vector.extract_strided_slice %0 {offsets = [2, 15], sizes = [1, 497], strides = [1, 1]} : vector<9x512xf32> to vector<1x497xf32>
    %34 = vector.broadcast %33 : vector<1x497xf32> to vector<4x497xf32>
    %35 = arith.mulf %32, %34 : vector<4x497xf32>
    %c20 = arith.constant 20 : index
    %c15_14 = arith.constant 15 : index
    %36 = vector.load %arg13[%c20, %c15_14] : memref<72x512xf32, #tpu.memory_space<vmem>>, vector<4x497xf32>
    tpu.vector_store %arg13[%c20, %c15_14], %35 {strides = array<i32>} : memref<72x512xf32, #tpu.memory_space<vmem>>, vector<4x497xf32>,
    %37 = vector.extract_strided_slice %5 {offsets = [0, 0], sizes = [4, 511], strides = [1, 1]} : vector<4x512xf32> to vector<4x511xf32>
    %38 = vector.extract_strided_slice %0 {offsets = [3, 1], sizes = [1, 511], strides = [1, 1]} : vector<9x512xf32> to vector<1x511xf32>
    %39 = vector.broadcast %38 : vector<1x511xf32> to vector<4x511xf32>
    %40 = arith.mulf %37, %39 : vector<4x511xf32>
    %c24 = arith.constant 24 : index
    %c1 = arith.constant 1 : index
    %41 = vector.load %arg13[%c24, %c1] : memref<72x512xf32, #tpu.memory_space<vmem>>, vector<4x511xf32>
    tpu.vector_store %arg13[%c24, %c1], %40 {strides = array<i32>} : memref<72x512xf32, #tpu.memory_space<vmem>>, vector<4x511xf32>,
    %42 = vector.extract_strided_slice %6 {offsets = [0, 0], sizes = [4, 511], strides = [1, 1]} : vector<4x512xf32> to vector<4x511xf32>
    %43 = vector.extract_strided_slice %0 {offsets = [3, 1], sizes = [1, 511], strides = [1, 1]} : vector<9x512xf32> to vector<1x511xf32>
    %44 = vector.broadcast %43 : vector<1x511xf32> to vector<4x511xf32>
    %45 = arith.mulf %42, %44 : vector<4x511xf32>
    %c28 = arith.constant 28 : index
    %c1_15 = arith.constant 1 : index
    %46 = vector.load %arg13[%c28, %c1_15] : memref<72x512xf32, #tpu.memory_space<vmem>>, vector<4x511xf32>
    tpu.vector_store %arg13[%c28, %c1_15], %45 {strides = array<i32>} : memref<72x512xf32, #tpu.memory_space<vmem>>, vector<4x511xf32>,
    %c32 = arith.constant 32 : index
    %c0_16 = arith.constant 0 : index
    %47 = vector.load %arg13[%c32, %c0_16] : memref<72x512xf32, #tpu.memory_space<vmem>>, vector<4x512xf32>
    tpu.vector_store %arg13[%c32, %c0_16], %5 {strides = array<i32>} : memref<72x512xf32, #tpu.memory_space<vmem>>, vector<4x512xf32>,
    %c36 = arith.constant 36 : index
    %c0_17 = arith.constant 0 : index
    %48 = vector.load %arg13[%c36, %c0_17] : memref<72x512xf32, #tpu.memory_space<vmem>>, vector<4x512xf32>
    tpu.vector_store %arg13[%c36, %c0_17], %6 {strides = array<i32>} : memref<72x512xf32, #tpu.memory_space<vmem>>, vector<4x512xf32>,
    %49 = vector.extract_strided_slice %5 {offsets = [0, 1], sizes = [4, 511], strides = [1, 1]} : vector<4x512xf32> to vector<4x511xf32>
    %50 = vector.extract_strided_slice %0 {offsets = [5, 0], sizes = [1, 511], strides = [1, 1]} : vector<9x512xf32> to vector<1x511xf32>
    %51 = vector.broadcast %50 : vector<1x511xf32> to vector<4x511xf32>
    %52 = arith.mulf %49, %51 : vector<4x511xf32>
    %c40 = arith.constant 40 : index
    %c0_18 = arith.constant 0 : index
    %53 = vector.load %arg13[%c40, %c0_18] : memref<72x512xf32, #tpu.memory_space<vmem>>, vector<4x511xf32>
    tpu.vector_store %arg13[%c40, %c0_18], %52 {strides = array<i32>} : memref<72x512xf32, #tpu.memory_space<vmem>>, vector<4x511xf32>,
    %54 = vector.extract_strided_slice %6 {offsets = [0, 1], sizes = [4, 511], strides = [1, 1]} : vector<4x512xf32> to vector<4x511xf32>
    %55 = vector.extract_strided_slice %0 {offsets = [5, 0], sizes = [1, 511], strides = [1, 1]} : vector<9x512xf32> to vector<1x511xf32>
    %56 = vector.broadcast %55 : vector<1x511xf32> to vector<4x511xf32>
    %57 = arith.mulf %54, %56 : vector<4x511xf32>
    %c44 = arith.constant 44 : index
    %c0_19 = arith.constant 0 : index
    %58 = vector.load %arg13[%c44, %c0_19] : memref<72x512xf32, #tpu.memory_space<vmem>>, vector<4x511xf32>
    tpu.vector_store %arg13[%c44, %c0_19], %57 {strides = array<i32>} : memref<72x512xf32, #tpu.memory_space<vmem>>, vector<4x511xf32>,
    %59 = vector.extract_strided_slice %5 {offsets = [0, 15], sizes = [4, 497], strides = [1, 1]} : vector<4x512xf32> to vector<4x497xf32>
    %60 = vector.extract_strided_slice %0 {offsets = [6, 0], sizes = [1, 497], strides = [1, 1]} : vector<9x512xf32> to vector<1x497xf32>
    %61 = vector.broadcast %60 : vector<1x497xf32> to vector<4x497xf32>
    %62 = arith.mulf %59, %61 : vector<4x497xf32>
    %c48 = arith.constant 48 : index
    %c0_20 = arith.constant 0 : index
    %63 = vector.load %arg13[%c48, %c0_20] : memref<72x512xf32, #tpu.memory_space<vmem>>, vector<4x497xf32>
    tpu.vector_store %arg13[%c48, %c0_20], %62 {strides = array<i32>} : memref<72x512xf32, #tpu.memory_space<vmem>>, vector<4x497xf32>,
    %64 = vector.extract_strided_slice %6 {offsets = [0, 15], sizes = [4, 497], strides = [1, 1]} : vector<4x512xf32> to vector<4x497xf32>
    %65 = vector.extract_strided_slice %0 {offsets = [6, 0], sizes = [1, 497], strides = [1, 1]} : vector<9x512xf32> to vector<1x497xf32>
    %66 = vector.broadcast %65 : vector<1x497xf32> to vector<4x497xf32>
    %67 = arith.mulf %64, %66 : vector<4x497xf32>
    %c52 = arith.constant 52 : index
    %c0_21 = arith.constant 0 : index
    %68 = vector.load %arg13[%c52, %c0_21] : memref<72x512xf32, #tpu.memory_space<vmem>>, vector<4x497xf32>
    tpu.vector_store %arg13[%c52, %c0_21], %67 {strides = array<i32>} : memref<72x512xf32, #tpu.memory_space<vmem>>, vector<4x497xf32>,
    %69 = vector.extract_strided_slice %5 {offsets = [0, 16], sizes = [4, 496], strides = [1, 1]} : vector<4x512xf32> to vector<4x496xf32>
    %70 = vector.extract_strided_slice %0 {offsets = [7, 0], sizes = [1, 496], strides = [1, 1]} : vector<9x512xf32> to vector<1x496xf32>
    %71 = vector.broadcast %70 : vector<1x496xf32> to vector<4x496xf32>
    %72 = arith.mulf %69, %71 : vector<4x496xf32>
    %c56 = arith.constant 56 : index
    %c0_22 = arith.constant 0 : index
    %73 = vector.load %arg13[%c56, %c0_22] : memref<72x512xf32, #tpu.memory_space<vmem>>, vector<4x496xf32>
    tpu.vector_store %arg13[%c56, %c0_22], %72 {strides = array<i32>} : memref<72x512xf32, #tpu.memory_space<vmem>>, vector<4x496xf32>,
    %74 = vector.extract_strided_slice %6 {offsets = [0, 16], sizes = [4, 496], strides = [1, 1]} : vector<4x512xf32> to vector<4x496xf32>
    %75 = vector.extract_strided_slice %0 {offsets = [7, 0], sizes = [1, 496], strides = [1, 1]} : vector<9x512xf32> to vector<1x496xf32>
    %76 = vector.broadcast %75 : vector<1x496xf32> to vector<4x496xf32>
    %77 = arith.mulf %74, %76 : vector<4x496xf32>
    %c60 = arith.constant 60 : index
    %c0_23 = arith.constant 0 : index
    %78 = vector.load %arg13[%c60, %c0_23] : memref<72x512xf32, #tpu.memory_space<vmem>>, vector<4x496xf32>
    tpu.vector_store %arg13[%c60, %c0_23], %77 {strides = array<i32>} : memref<72x512xf32, #tpu.memory_space<vmem>>, vector<4x496xf32>,
    %79 = vector.extract_strided_slice %5 {offsets = [0, 17], sizes = [4, 495], strides = [1, 1]} : vector<4x512xf32> to vector<4x495xf32>
    %80 = vector.extract_strided_slice %0 {offsets = [8, 0], sizes = [1, 495], strides = [1, 1]} : vector<9x512xf32> to vector<1x495xf32>
    %81 = vector.broadcast %80 : vector<1x495xf32> to vector<4x495xf32>
    %82 = arith.mulf %79, %81 : vector<4x495xf32>
    %c64 = arith.constant 64 : index
    %c0_24 = arith.constant 0 : index
    %83 = vector.load %arg13[%c64, %c0_24] : memref<72x512xf32, #tpu.memory_space<vmem>>, vector<4x495xf32>
    tpu.vector_store %arg13[%c64, %c0_24], %82 {strides = array<i32>} : memref<72x512xf32, #tpu.memory_space<vmem>>, vector<4x495xf32>,
    %84 = vector.extract_strided_slice %6 {offsets = [0, 17], sizes = [4, 495], strides = [1, 1]} : vector<4x512xf32> to vector<4x495xf32>
    %85 = vector.extract_strided_slice %0 {offsets = [8, 0], sizes = [1, 495], strides = [1, 1]} : vector<9x512xf32> to vector<1x495xf32>
    %86 = vector.broadcast %85 : vector<1x495xf32> to vector<4x495xf32>
    %87 = arith.mulf %84, %86 : vector<4x495xf32>
    %c68 = arith.constant 68 : index
    %c0_25 = arith.constant 0 : index
    %88 = vector.load %arg13[%c68, %c0_25] : memref<72x512xf32, #tpu.memory_space<vmem>>, vector<4x495xf32>
    tpu.vector_store %arg13[%c68, %c0_25], %87 {strides = array<i32>} : memref<72x512xf32, #tpu.memory_space<vmem>>, vector<4x495xf32>,
    %c0_26 = arith.constant 0 : index
    %c0_27 = arith.constant 0 : index
    %89 = vector.load %arg3[%c0_26, %c0_27] : memref<4x72xf32, #tpu.memory_space<vmem>>, vector<4x72xf32>
    %c0_28 = arith.constant 0 : index
    %c0_29 = arith.constant 0 : index
    %90 = vector.load %arg13[%c0_28, %c0_29] : memref<72x512xf32, #tpu.memory_space<vmem>>, vector<72x512xf32>
    %cst_30 = arith.constant dense<0.000000e+00> : vector<4x512xf32>
    %91 = tpu.matmul %89, %90, %cst_30 {dimension_numbers = #tpu.dot_dimension_numbers<[1], [0], [0], [1], [0, 0, 1, 1], [], []>} : vector<4x72xf32>, vector<72x512xf32>, vector<4x512xf32> -> vector<4x512xf32>
    %cst_31 = arith.constant dense<0.000000e+00> : vector<4xf32>
    %92 = vector.multi_reduction <add>, %91, %cst_31 [1] : vector<4x512xf32> to vector<4xf32>
    %93 = vector.shape_cast %92 : vector<4xf32> to vector<4x1xf32>
    %cst_32 = arith.constant 5.120000e+02 : f32
    %94 = vector.broadcast %cst_32 : f32 to vector<4x1xf32>
    %95 = arith.divf %93, %94 : vector<4x1xf32>
    %96 = vector.broadcast %95 : vector<4x1xf32> to vector<4x512xf32>
    %97 = arith.subf %91, %96 : vector<4x512xf32>
    %98 = arith.mulf %97, %97 : vector<4x512xf32>
    %cst_33 = arith.constant dense<0.000000e+00> : vector<4xf32>
    %99 = vector.multi_reduction <add>, %98, %cst_33 [1] : vector<4x512xf32> to vector<4xf32>
    %100 = vector.shape_cast %99 : vector<4xf32> to vector<4x1xf32>
    %cst_34 = arith.constant 5.120000e+02 : f32
    %101 = vector.broadcast %cst_34 : f32 to vector<4x1xf32>
    %102 = arith.divf %100, %101 : vector<4x1xf32>
    %103 = vector.broadcast %95 : vector<4x1xf32> to vector<4x512xf32>
    %104 = arith.subf %91, %103 : vector<4x512xf32>
    %cst_35 = arith.constant 9.99999974E-6 : f32
    %105 = vector.broadcast %cst_35 : f32 to vector<4x1xf32>
    %106 = arith.addf %102, %105 : vector<4x1xf32>
    %107 = math.rsqrt %106 : vector<4x1xf32>
    %108 = vector.broadcast %107 : vector<4x1xf32> to vector<4x512xf32>
    %109 = arith.mulf %104, %108 : vector<4x512xf32>
    %c0_36 = arith.constant 0 : index
    %c0_37 = arith.constant 0 : index
    %110 = vector.load %arg6[%c0_36, %c0_37] : memref<4x1xf32, #tpu.memory_space<vmem>>, vector<4x1xf32>
    %111 = vector.broadcast %110 : vector<4x1xf32> to vector<4x512xf32>
    %112 = arith.mulf %109, %111 : vector<4x512xf32>
    %c0_38 = arith.constant 0 : index
    %c0_39 = arith.constant 0 : index
    %113 = vector.load %arg7[%c0_38, %c0_39] : memref<4x1xf32, #tpu.memory_space<vmem>>, vector<4x1xf32>
    %114 = vector.broadcast %113 : vector<4x1xf32> to vector<4x512xf32>
    %115 = arith.addf %112, %114 : vector<4x512xf32>
    %cst_40 = arith.constant 0.000000e+00 : f32
    %116 = vector.broadcast %cst_40 : f32 to vector<4x512xf32>
    %117 = arith.maximumf %115, %116 : vector<4x512xf32>
    %118 = vector.extract_strided_slice %117 {offsets = [0, 0], sizes = [4, 495], strides = [1, 1]} : vector<4x512xf32> to vector<4x495xf32>
    %119 = vector.extract_strided_slice %0 {offsets = [0, 17], sizes = [1, 495], strides = [1, 1]} : vector<9x512xf32> to vector<1x495xf32>
    %120 = vector.broadcast %119 : vector<1x495xf32> to vector<4x495xf32>
    %121 = arith.mulf %118, %120 : vector<4x495xf32>
    %c0_41 = arith.constant 0 : index
    %c17_42 = arith.constant 17 : index
    %122 = vector.load %arg14[%c0_41, %c17_42] : memref<36x512xf32, #tpu.memory_space<vmem>>, vector<4x495xf32>
    tpu.vector_store %arg14[%c0_41, %c17_42], %121 {strides = array<i32>} : memref<36x512xf32, #tpu.memory_space<vmem>>, vector<4x495xf32>,
    %123 = vector.extract_strided_slice %117 {offsets = [0, 0], sizes = [4, 496], strides = [1, 1]} : vector<4x512xf32> to vector<4x496xf32>
    %124 = vector.extract_strided_slice %0 {offsets = [1, 16], sizes = [1, 496], strides = [1, 1]} : vector<9x512xf32> to vector<1x496xf32>
    %125 = vector.broadcast %124 : vector<1x496xf32> to vector<4x496xf32>
    %126 = arith.mulf %123, %125 : vector<4x496xf32>
    %c4_43 = arith.constant 4 : index
    %c16_44 = arith.constant 16 : index
    %127 = vector.load %arg14[%c4_43, %c16_44] : memref<36x512xf32, #tpu.memory_space<vmem>>, vector<4x496xf32>
    tpu.vector_store %arg14[%c4_43, %c16_44], %126 {strides = array<i32>} : memref<36x512xf32, #tpu.memory_space<vmem>>, vector<4x496xf32>,
    %128 = vector.extract_strided_slice %117 {offsets = [0, 0], sizes = [4, 497], strides = [1, 1]} : vector<4x512xf32> to vector<4x497xf32>
    %129 = vector.extract_strided_slice %0 {offsets = [2, 15], sizes = [1, 497], strides = [1, 1]} : vector<9x512xf32> to vector<1x497xf32>
    %130 = vector.broadcast %129 : vector<1x497xf32> to vector<4x497xf32>
    %131 = arith.mulf %128, %130 : vector<4x497xf32>
    %c8_45 = arith.constant 8 : index
    %c15_46 = arith.constant 15 : index
    %132 = vector.load %arg14[%c8_45, %c15_46] : memref<36x512xf32, #tpu.memory_space<vmem>>, vector<4x497xf32>
    tpu.vector_store %arg14[%c8_45, %c15_46], %131 {strides = array<i32>} : memref<36x512xf32, #tpu.memory_space<vmem>>, vector<4x497xf32>,
    %133 = vector.extract_strided_slice %117 {offsets = [0, 0], sizes = [4, 511], strides = [1, 1]} : vector<4x512xf32> to vector<4x511xf32>
    %134 = vector.extract_strided_slice %0 {offsets = [3, 1], sizes = [1, 511], strides = [1, 1]} : vector<9x512xf32> to vector<1x511xf32>
    %135 = vector.broadcast %134 : vector<1x511xf32> to vector<4x511xf32>
    %136 = arith.mulf %133, %135 : vector<4x511xf32>
    %c12_47 = arith.constant 12 : index
    %c1_48 = arith.constant 1 : index
    %137 = vector.load %arg14[%c12_47, %c1_48] : memref<36x512xf32, #tpu.memory_space<vmem>>, vector<4x511xf32>
    tpu.vector_store %arg14[%c12_47, %c1_48], %136 {strides = array<i32>} : memref<36x512xf32, #tpu.memory_space<vmem>>, vector<4x511xf32>,
    %c16_49 = arith.constant 16 : index
    %c0_50 = arith.constant 0 : index
    %138 = vector.load %arg14[%c16_49, %c0_50] : memref<36x512xf32, #tpu.memory_space<vmem>>, vector<4x512xf32>
    tpu.vector_store %arg14[%c16_49, %c0_50], %117 {strides = array<i32>} : memref<36x512xf32, #tpu.memory_space<vmem>>, vector<4x512xf32>,
    %139 = vector.extract_strided_slice %117 {offsets = [0, 1], sizes = [4, 511], strides = [1, 1]} : vector<4x512xf32> to vector<4x511xf32>
    %140 = vector.extract_strided_slice %0 {offsets = [5, 0], sizes = [1, 511], strides = [1, 1]} : vector<9x512xf32> to vector<1x511xf32>
    %141 = vector.broadcast %140 : vector<1x511xf32> to vector<4x511xf32>
    %142 = arith.mulf %139, %141 : vector<4x511xf32>
    %c20_51 = arith.constant 20 : index
    %c0_52 = arith.constant 0 : index
    %143 = vector.load %arg14[%c20_51, %c0_52] : memref<36x512xf32, #tpu.memory_space<vmem>>, vector<4x511xf32>
    tpu.vector_store %arg14[%c20_51, %c0_52], %142 {strides = array<i32>} : memref<36x512xf32, #tpu.memory_space<vmem>>, vector<4x511xf32>,
    %144 = vector.extract_strided_slice %117 {offsets = [0, 15], sizes = [4, 497], strides = [1, 1]} : vector<4x512xf32> to vector<4x497xf32>
    %145 = vector.extract_strided_slice %0 {offsets = [6, 0], sizes = [1, 497], strides = [1, 1]} : vector<9x512xf32> to vector<1x497xf32>
    %146 = vector.broadcast %145 : vector<1x497xf32> to vector<4x497xf32>
    %147 = arith.mulf %144, %146 : vector<4x497xf32>
    %c24_53 = arith.constant 24 : index
    %c0_54 = arith.constant 0 : index
    %148 = vector.load %arg14[%c24_53, %c0_54] : memref<36x512xf32, #tpu.memory_space<vmem>>, vector<4x497xf32>
    tpu.vector_store %arg14[%c24_53, %c0_54], %147 {strides = array<i32>} : memref<36x512xf32, #tpu.memory_space<vmem>>, vector<4x497xf32>,
    %149 = vector.extract_strided_slice %117 {offsets = [0, 16], sizes = [4, 496], strides = [1, 1]} : vector<4x512xf32> to vector<4x496xf32>
    %150 = vector.extract_strided_slice %0 {offsets = [7, 0], sizes = [1, 496], strides = [1, 1]} : vector<9x512xf32> to vector<1x496xf32>
    %151 = vector.broadcast %150 : vector<1x496xf32> to vector<4x496xf32>
    %152 = arith.mulf %149, %151 : vector<4x496xf32>
    %c28_55 = arith.constant 28 : index
    %c0_56 = arith.constant 0 : index
    %153 = vector.load %arg14[%c28_55, %c0_56] : memref<36x512xf32, #tpu.memory_space<vmem>>, vector<4x496xf32>
    tpu.vector_store %arg14[%c28_55, %c0_56], %152 {strides = array<i32>} : memref<36x512xf32, #tpu.memory_space<vmem>>, vector<4x496xf32>,
    %154 = vector.extract_strided_slice %117 {offsets = [0, 17], sizes = [4, 495], strides = [1, 1]} : vector<4x512xf32> to vector<4x495xf32>
    %155 = vector.extract_strided_slice %0 {offsets = [8, 0], sizes = [1, 495], strides = [1, 1]} : vector<9x512xf32> to vector<1x495xf32>
    %156 = vector.broadcast %155 : vector<1x495xf32> to vector<4x495xf32>
    %157 = arith.mulf %154, %156 : vector<4x495xf32>
    %c32_57 = arith.constant 32 : index
    %c0_58 = arith.constant 0 : index
    %158 = vector.load %arg14[%c32_57, %c0_58] : memref<36x512xf32, #tpu.memory_space<vmem>>, vector<4x495xf32>
    tpu.vector_store %arg14[%c32_57, %c0_58], %157 {strides = array<i32>} : memref<36x512xf32, #tpu.memory_space<vmem>>, vector<4x495xf32>,
    %c0_59 = arith.constant 0 : index
    %c0_60 = arith.constant 0 : index
    %159 = vector.load %arg4[%c0_59, %c0_60] : memref<4x36xf32, #tpu.memory_space<vmem>>, vector<4x36xf32>
    %c0_61 = arith.constant 0 : index
    %c0_62 = arith.constant 0 : index
    %160 = vector.load %arg14[%c0_61, %c0_62] : memref<36x512xf32, #tpu.memory_space<vmem>>, vector<36x512xf32>
    %cst_63 = arith.constant dense<0.000000e+00> : vector<4x512xf32>
    %161 = tpu.matmul %159, %160, %cst_63 {dimension_numbers = #tpu.dot_dimension_numbers<[1], [0], [0], [1], [0, 0, 1, 1], [], []>} : vector<4x36xf32>, vector<36x512xf32>, vector<4x512xf32> -> vector<4x512xf32>
    %cst_64 = arith.constant dense<0.000000e+00> : vector<4xf32>
    %162 = vector.multi_reduction <add>, %161, %cst_64 [1] : vector<4x512xf32> to vector<4xf32>
    %163 = vector.shape_cast %162 : vector<4xf32> to vector<4x1xf32>
    %cst_65 = arith.constant 5.120000e+02 : f32
    %164 = vector.broadcast %cst_65 : f32 to vector<4x1xf32>
    %165 = arith.divf %163, %164 : vector<4x1xf32>
    %166 = vector.broadcast %165 : vector<4x1xf32> to vector<4x512xf32>
    %167 = arith.subf %161, %166 : vector<4x512xf32>
    %168 = arith.mulf %167, %167 : vector<4x512xf32>
    %cst_66 = arith.constant dense<0.000000e+00> : vector<4xf32>
    %169 = vector.multi_reduction <add>, %168, %cst_66 [1] : vector<4x512xf32> to vector<4xf32>
    %170 = vector.shape_cast %169 : vector<4xf32> to vector<4x1xf32>
    %cst_67 = arith.constant 5.120000e+02 : f32
    %171 = vector.broadcast %cst_67 : f32 to vector<4x1xf32>
    %172 = arith.divf %170, %171 : vector<4x1xf32>
    %173 = vector.broadcast %165 : vector<4x1xf32> to vector<4x512xf32>
    %174 = arith.subf %161, %173 : vector<4x512xf32>
    %cst_68 = arith.constant 9.99999974E-6 : f32
    %175 = vector.broadcast %cst_68 : f32 to vector<4x1xf32>
    %176 = arith.addf %172, %175 : vector<4x1xf32>
    %177 = math.rsqrt %176 : vector<4x1xf32>
    %178 = vector.broadcast %177 : vector<4x1xf32> to vector<4x512xf32>
    %179 = arith.mulf %174, %178 : vector<4x512xf32>
    %c0_69 = arith.constant 0 : index
    %c0_70 = arith.constant 0 : index
    %180 = vector.load %arg8[%c0_69, %c0_70] : memref<4x1xf32, #tpu.memory_space<vmem>>, vector<4x1xf32>
    %181 = vector.broadcast %180 : vector<4x1xf32> to vector<4x512xf32>
    %182 = arith.mulf %179, %181 : vector<4x512xf32>
    %c0_71 = arith.constant 0 : index
    %c0_72 = arith.constant 0 : index
    %183 = vector.load %arg9[%c0_71, %c0_72] : memref<4x1xf32, #tpu.memory_space<vmem>>, vector<4x1xf32>
    %184 = vector.broadcast %183 : vector<4x1xf32> to vector<4x512xf32>
    %185 = arith.addf %182, %184 : vector<4x512xf32>
    %cst_73 = arith.constant 0.000000e+00 : f32
    %186 = vector.broadcast %cst_73 : f32 to vector<4x512xf32>
    %187 = arith.maximumf %185, %186 : vector<4x512xf32>
    %188 = vector.extract_strided_slice %187 {offsets = [0, 0], sizes = [4, 495], strides = [1, 1]} : vector<4x512xf32> to vector<4x495xf32>
    %189 = vector.extract_strided_slice %0 {offsets = [0, 17], sizes = [1, 495], strides = [1, 1]} : vector<9x512xf32> to vector<1x495xf32>
    %190 = vector.broadcast %189 : vector<1x495xf32> to vector<4x495xf32>
    %191 = arith.mulf %188, %190 : vector<4x495xf32>
    %c0_74 = arith.constant 0 : index
    %c17_75 = arith.constant 17 : index
    %192 = vector.load %arg14[%c0_74, %c17_75] : memref<36x512xf32, #tpu.memory_space<vmem>>, vector<4x495xf32>
    tpu.vector_store %arg14[%c0_74, %c17_75], %191 {strides = array<i32>} : memref<36x512xf32, #tpu.memory_space<vmem>>, vector<4x495xf32>,
    %193 = vector.extract_strided_slice %187 {offsets = [0, 0], sizes = [4, 496], strides = [1, 1]} : vector<4x512xf32> to vector<4x496xf32>
    %194 = vector.extract_strided_slice %0 {offsets = [1, 16], sizes = [1, 496], strides = [1, 1]} : vector<9x512xf32> to vector<1x496xf32>
    %195 = vector.broadcast %194 : vector<1x496xf32> to vector<4x496xf32>
    %196 = arith.mulf %193, %195 : vector<4x496xf32>
    %c4_76 = arith.constant 4 : index
    %c16_77 = arith.constant 16 : index
    %197 = vector.load %arg14[%c4_76, %c16_77] : memref<36x512xf32, #tpu.memory_space<vmem>>, vector<4x496xf32>
    tpu.vector_store %arg14[%c4_76, %c16_77], %196 {strides = array<i32>} : memref<36x512xf32, #tpu.memory_space<vmem>>, vector<4x496xf32>,
    %198 = vector.extract_strided_slice %187 {offsets = [0, 0], sizes = [4, 497], strides = [1, 1]} : vector<4x512xf32> to vector<4x497xf32>
    %199 = vector.extract_strided_slice %0 {offsets = [2, 15], sizes = [1, 497], strides = [1, 1]} : vector<9x512xf32> to vector<1x497xf32>
    %200 = vector.broadcast %199 : vector<1x497xf32> to vector<4x497xf32>
    %201 = arith.mulf %198, %200 : vector<4x497xf32>
    %c8_78 = arith.constant 8 : index
    %c15_79 = arith.constant 15 : index
    %202 = vector.load %arg14[%c8_78, %c15_79] : memref<36x512xf32, #tpu.memory_space<vmem>>, vector<4x497xf32>
    tpu.vector_store %arg14[%c8_78, %c15_79], %201 {strides = array<i32>} : memref<36x512xf32, #tpu.memory_space<vmem>>, vector<4x497xf32>,
    %203 = vector.extract_strided_slice %187 {offsets = [0, 0], sizes = [4, 511], strides = [1, 1]} : vector<4x512xf32> to vector<4x511xf32>
    %204 = vector.extract_strided_slice %0 {offsets = [3, 1], sizes = [1, 511], strides = [1, 1]} : vector<9x512xf32> to vector<1x511xf32>
    %205 = vector.broadcast %204 : vector<1x511xf32> to vector<4x511xf32>
    %206 = arith.mulf %203, %205 : vector<4x511xf32>
    %c12_80 = arith.constant 12 : index
    %c1_81 = arith.constant 1 : index
    %207 = vector.load %arg14[%c12_80, %c1_81] : memref<36x512xf32, #tpu.memory_space<vmem>>, vector<4x511xf32>
    tpu.vector_store %arg14[%c12_80, %c1_81], %206 {strides = array<i32>} : memref<36x512xf32, #tpu.memory_space<vmem>>, vector<4x511xf32>,
    %c16_82 = arith.constant 16 : index
    %c0_83 = arith.constant 0 : index
    %208 = vector.load %arg14[%c16_82, %c0_83] : memref<36x512xf32, #tpu.memory_space<vmem>>, vector<4x512xf32>
    tpu.vector_store %arg14[%c16_82, %c0_83], %187 {strides = array<i32>} : memref<36x512xf32, #tpu.memory_space<vmem>>, vector<4x512xf32>,
    %209 = vector.extract_strided_slice %187 {offsets = [0, 1], sizes = [4, 511], strides = [1, 1]} : vector<4x512xf32> to vector<4x511xf32>
    %210 = vector.extract_strided_slice %0 {offsets = [5, 0], sizes = [1, 511], strides = [1, 1]} : vector<9x512xf32> to vector<1x511xf32>
    %211 = vector.broadcast %210 : vector<1x511xf32> to vector<4x511xf32>
    %212 = arith.mulf %209, %211 : vector<4x511xf32>
    %c20_84 = arith.constant 20 : index
    %c0_85 = arith.constant 0 : index
    %213 = vector.load %arg14[%c20_84, %c0_85] : memref<36x512xf32, #tpu.memory_space<vmem>>, vector<4x511xf32>
    tpu.vector_store %arg14[%c20_84, %c0_85], %212 {strides = array<i32>} : memref<36x512xf32, #tpu.memory_space<vmem>>, vector<4x511xf32>,
    %214 = vector.extract_strided_slice %187 {offsets = [0, 15], sizes = [4, 497], strides = [1, 1]} : vector<4x512xf32> to vector<4x497xf32>
    %215 = vector.extract_strided_slice %0 {offsets = [6, 0], sizes = [1, 497], strides = [1, 1]} : vector<9x512xf32> to vector<1x497xf32>
    %216 = vector.broadcast %215 : vector<1x497xf32> to vector<4x497xf32>
    %217 = arith.mulf %214, %216 : vector<4x497xf32>
    %c24_86 = arith.constant 24 : index
    %c0_87 = arith.constant 0 : index
    %218 = vector.load %arg14[%c24_86, %c0_87] : memref<36x512xf32, #tpu.memory_space<vmem>>, vector<4x497xf32>
    tpu.vector_store %arg14[%c24_86, %c0_87], %217 {strides = array<i32>} : memref<36x512xf32, #tpu.memory_space<vmem>>, vector<4x497xf32>,
    %219 = vector.extract_strided_slice %187 {offsets = [0, 16], sizes = [4, 496], strides = [1, 1]} : vector<4x512xf32> to vector<4x496xf32>
    %220 = vector.extract_strided_slice %0 {offsets = [7, 0], sizes = [1, 496], strides = [1, 1]} : vector<9x512xf32> to vector<1x496xf32>
    %221 = vector.broadcast %220 : vector<1x496xf32> to vector<4x496xf32>
    %222 = arith.mulf %219, %221 : vector<4x496xf32>
    %c28_88 = arith.constant 28 : index
    %c0_89 = arith.constant 0 : index
    %223 = vector.load %arg14[%c28_88, %c0_89] : memref<36x512xf32, #tpu.memory_space<vmem>>, vector<4x496xf32>
    tpu.vector_store %arg14[%c28_88, %c0_89], %222 {strides = array<i32>} : memref<36x512xf32, #tpu.memory_space<vmem>>, vector<4x496xf32>,
    %224 = vector.extract_strided_slice %187 {offsets = [0, 17], sizes = [4, 495], strides = [1, 1]} : vector<4x512xf32> to vector<4x495xf32>
    %225 = vector.extract_strided_slice %0 {offsets = [8, 0], sizes = [1, 495], strides = [1, 1]} : vector<9x512xf32> to vector<1x495xf32>
    %226 = vector.broadcast %225 : vector<1x495xf32> to vector<4x495xf32>
    %227 = arith.mulf %224, %226 : vector<4x495xf32>
    %c32_90 = arith.constant 32 : index
    %c0_91 = arith.constant 0 : index
    %228 = vector.load %arg14[%c32_90, %c0_91] : memref<36x512xf32, #tpu.memory_space<vmem>>, vector<4x495xf32>
    tpu.vector_store %arg14[%c32_90, %c0_91], %227 {strides = array<i32>} : memref<36x512xf32, #tpu.memory_space<vmem>>, vector<4x495xf32>,
    %c0_92 = arith.constant 0 : index
    %c0_93 = arith.constant 0 : index
    %229 = vector.load %arg5[%c0_92, %c0_93] : memref<4x36xf32, #tpu.memory_space<vmem>>, vector<4x36xf32>
    %c0_94 = arith.constant 0 : index
    %c0_95 = arith.constant 0 : index
    %230 = vector.load %arg14[%c0_94, %c0_95] : memref<36x512xf32, #tpu.memory_space<vmem>>, vector<36x512xf32>
    %cst_96 = arith.constant dense<0.000000e+00> : vector<4x512xf32>
    %231 = tpu.matmul %229, %230, %cst_96 {dimension_numbers = #tpu.dot_dimension_numbers<[1], [0], [0], [1], [0, 0, 1, 1], [], []>} : vector<4x36xf32>, vector<36x512xf32>, vector<4x512xf32> -> vector<4x512xf32>
    %cst_97 = arith.constant dense<0.000000e+00> : vector<4xf32>
    %232 = vector.multi_reduction <add>, %231, %cst_97 [1] : vector<4x512xf32> to vector<4xf32>
    %233 = vector.shape_cast %232 : vector<4xf32> to vector<4x1xf32>
    %cst_98 = arith.constant 5.120000e+02 : f32
    %234 = vector.broadcast %cst_98 : f32 to vector<4x1xf32>
    %235 = arith.divf %233, %234 : vector<4x1xf32>
    %236 = vector.broadcast %235 : vector<4x1xf32> to vector<4x512xf32>
    %237 = arith.subf %231, %236 : vector<4x512xf32>
    %238 = arith.mulf %237, %237 : vector<4x512xf32>
    %cst_99 = arith.constant dense<0.000000e+00> : vector<4xf32>
    %239 = vector.multi_reduction <add>, %238, %cst_99 [1] : vector<4x512xf32> to vector<4xf32>
    %240 = vector.shape_cast %239 : vector<4xf32> to vector<4x1xf32>
    %cst_100 = arith.constant 5.120000e+02 : f32
    %241 = vector.broadcast %cst_100 : f32 to vector<4x1xf32>
    %242 = arith.divf %240, %241 : vector<4x1xf32>
    %243 = vector.broadcast %235 : vector<4x1xf32> to vector<4x512xf32>
    %244 = arith.subf %231, %243 : vector<4x512xf32>
    %cst_101 = arith.constant 9.99999974E-6 : f32
    %245 = vector.broadcast %cst_101 : f32 to vector<4x1xf32>
    %246 = arith.addf %242, %245 : vector<4x1xf32>
    %247 = math.rsqrt %246 : vector<4x1xf32>
    %248 = vector.broadcast %247 : vector<4x1xf32> to vector<4x512xf32>
    %249 = arith.mulf %244, %248 : vector<4x512xf32>
    %c0_102 = arith.constant 0 : index
    %c0_103 = arith.constant 0 : index
    %250 = vector.load %arg10[%c0_102, %c0_103] : memref<4x1xf32, #tpu.memory_space<vmem>>, vector<4x1xf32>
    %251 = vector.broadcast %250 : vector<4x1xf32> to vector<4x512xf32>
    %252 = arith.mulf %249, %251 : vector<4x512xf32>
    %c0_104 = arith.constant 0 : index
    %c0_105 = arith.constant 0 : index
    %253 = vector.load %arg11[%c0_104, %c0_105] : memref<4x1xf32, #tpu.memory_space<vmem>>, vector<4x1xf32>
    %254 = vector.broadcast %253 : vector<4x1xf32> to vector<4x512xf32>
    %255 = arith.addf %252, %254 : vector<4x512xf32>
    %256 = arith.addf %255, %117 : vector<4x512xf32>
    %cst_106 = arith.constant 0.000000e+00 : f32
    %257 = vector.broadcast %cst_106 : f32 to vector<4x512xf32>
    %258 = arith.maximumf %256, %257 : vector<4x512xf32>
    %c0_107 = arith.constant 0 : index
    %c0_108 = arith.constant 0 : index
    %259 = vector.load %arg12[%c0_107, %c0_108] : memref<4x512xf32, #tpu.memory_space<vmem>>, vector<4x512xf32>
    tpu.vector_store %arg12[%c0_107, %c0_108], %258 {strides = array<i32>} : memref<4x512xf32, #tpu.memory_space<vmem>>, vector<4x512xf32>,
    return
  }
}

</mosaic_0001>

<llo_original>
// kernel: unet_up_block_forward.2
$region0: #{unet_up_block_forward.2}
  #allocation0 [shape = 'u32[]', space=smem, size = 0x4, offset = 0x4, fixed_abs, tag = 'smem constant byte address 0x4 - core index']
  #allocation1 [shape = 'u32[144,128]{1,0:T(1,128)}', space=vmem, size = 0x12000, scoped, tag = 'internal scratch']
  %s0 = inlined_call_operand.vmem [shape: f32[8,128], index: 0, kind: input, shape index: {}]
  %s1 = inlined_call_operand.vmem [shape: f32[16,8], index: 1, kind: input, shape index: {}]
  %s2 = inlined_call_operand.vmem [shape: f32[16,1], index: 2, kind: input, shape index: {}]
  %s3 = inlined_call_operand.vmem [shape: f32[16,128], index: 3, kind: output, shape index: {}]
  %s4 = sld [smem:[#allocation0]]
  $region22: #{unet_up_block_forward.2} parent=0
    _
  %s6 = ssub.s32 1, %s4
  %s7 = scalar_select 0, %s6, %s4
  // Predicated region
  $region2: #{unet_up_block_forward.2} parent=0 // pred_check
    _
  $region3: #{unet_up_block_forward.2} parent=0 // pred_check_branch
    %9 = sbr.rel (0) target = $region5
  $region4: #{unet_up_block_forward.2} parent=0 // pred_region
    _
  $region5: #{unet_up_block_forward.2} parent=0 // pred_fallthru
    _
  // Predicated region
  $region6: #{unet_up_block_forward.2} parent=0 // pred_check
    _
  $region7: #{unet_up_block_forward.2} parent=0 // pred_check_branch
    %11 = sbr.rel (0) target = $region9
  $region8: #{unet_up_block_forward.2} parent=0 // pred_region
    _
  $region9: #{unet_up_block_forward.2} parent=0 // pred_fallthru
    _
  // Predicated region
  $region10: #{unet_up_block_forward.2} parent=0 // pred_check
    _
  $region11: #{unet_up_block_forward.2} parent=0 // pred_check_branch
    %13 = sbr.rel (0) target = $region13
  $region12: #{unet_up_block_forward.2} parent=0 // pred_region
    _
  $region13: #{unet_up_block_forward.2} parent=0 // pred_fallthru
    _
  %v14 = vld [vmem:[%s1] sm:$0xff]
  %v15 = vld [vmem:[%s1 + $0x8] sm:$0xff]
  %v16 = vld [vmem:[%s0] sm:$0xff]
  %v17 = vld [vmem:[%s2] sm:$0xff]
  %v18 = vld [vmem:[%s2 + $0x8] sm:$0xff]
  %20 = vset.pattern.permute.xlu0 0
  %21 = vperm.xlu0 %20, %v17
  %v22 = vpop.permute.xlu0 %21
  %25 = vset.pattern.permute.xlu0 0
  %26 = vperm.xlu0 %25, %v18
  %v27 = vpop.permute.xlu0 %26
  %vm29 = vcmask 64512
  %v31 = vsel %vm29, %v14, 0
  %v34 = vsel %vm29, %v15, 0
  %36 = vmatprep.subr.mxu0 0.0
  %37 = vmatpush1.msra.mxu0 %v16
  %38 = vmatprep.subr.mxu0 0.0
  %39 = vmatpush1.msra.mxu0 0.0
  %40 = vmatprep.subr.mxu0 0.0
  %41 = vmatpush1.msra.mxu0 0.0
  %42 = vmatprep.subr.mxu0 0.0
  %43 = vmatpush1.msra.mxu0 0.0
  %44 = vmatprep.subr.mxu0 0.0
  %45 = vmatpush1.msra.mxu0 0.0
  %46 = vmatprep.subr.mxu0 0.0
  %47 = vmatpush1.msra.mxu0 0.0
  %48 = vmatprep.subr.mxu0 0.0
  %49 = vmatpush1.msra.mxu0 0.0
  %50 = vmatprep.subr.mxu0 0.0
  %51 = vmatpush1.msra.mxu0 0.0
  %52 = vmatprep.subr.mxu0 0.0
  %53 = vmatpush1.msra.mxu0 0.0
  %54 = vmatprep.subr.mxu0 0.0
  %55 = vmatpush1.msra.mxu0 0.0
  %56 = vmatprep.subr.mxu0 0.0
  %57 = vmatpush1.msra.mxu0 0.0
  %58 = vmatprep.subr.mxu0 0.0
  %59 = vmatpush1.msra.mxu0 0.0
  %60 = vmatprep.subr.mxu0 0.0
  %61 = vmatpush1.msra.mxu0 0.0
  %62 = vmatprep.subr.mxu0 0.0
  %63 = vmatpush1.msra.mxu0 0.0
  %64 = vmatprep.subr.mxu0 0.0
  %65 = vmatpush1.msra.mxu0 0.0
  %66 = vmatprep.subr.mxu0 0.0
  %67 = vmatpush1.msra.mxu0 0.0
  %68 = vmatprep.subr.mxu0 0.0
  %69 = vmatpush1.msra.mxu0 0.0
  %70 = vmatprep.subr.mxu0 0.0
  %71 = vmatpush1.msra.mxu0 0.0
  %72 = vmatprep.subr.mxu0 0.0
  %73 = vmatpush1.msra.mxu0 0.0
  %74 = vmatprep.subr.mxu0 0.0
  %75 = vmatpush1.msra.mxu0 0.0
  %76 = vmatprep.subr.mxu0 0.0
  %77 = vmatpush1.msra.mxu0 0.0
  %78 = vmatprep.subr.mxu0 0.0
  %79 = vmatpush1.msra.mxu0 0.0
  %80 = vmatprep.subr.mxu0 0.0
  %81 = vmatpush1.msra.mxu0 0.0
  %82 = vmatprep.subr.mxu0 0.0
  %83 = vmatpush1.msra.mxu0 0.0
  %84 = vmatprep.subr.mxu0 0.0
  %85 = vmatpush1.msra.mxu0 0.0
  %86 = vmatprep.subr.mxu0 0.0
  %87 = vmatpush1.msra.mxu0 0.0
  %88 = vmatprep.subr.mxu0 0.0
  %89 = vmatpush1.msra.mxu0 0.0
  %90 = vmatprep.subr.mxu0 0.0
  %91 = vmatpush1.msra.mxu0 0.0
  %92 = vmatprep.subr.mxu0 0.0
  %93 = vmatpush1.msra.mxu0 0.0
  %94 = vmatprep.subr.mxu0 0.0
  %95 = vmatpush1.msra.mxu0 0.0
  %96 = vmatprep.subr.mxu0 0.0
  %97 = vmatpush1.msra.mxu0 0.0
  %98 = vmatprep.subr.mxu0 0.0
  %99 = vmatpush1.msra.mxu0 0.0
  %100 = vmatprep.mubr.f32.mxu0 0.0
  %101 = vmatmul.mubr.f32.gmra.mrb[0].mxu0 %v31
  %v102 = vpop.f32.mrb[0].mxu0
  %v103 = vadd.f32 %v22, %v102
  %v104 = vpop.f32.mrb[0].mxu0
  %105 = vmatprep.mubr.f32.mxu0 0.0
  %106 = vmatmul.mubr.f32.gmra.mrb[0].mxu0 %v34
  %v107 = vpop.f32.mrb[0].mxu0
  %v108 = vadd.f32 %v27, %v107
  %v109 = vpop.f32.mrb[0].mxu0
  %110 = vdwg.mxu0
  %111 = vst [vmem:[%s3] sm:$0xff] %v103
  %112 = vst [vmem:[%s3 + $0x8] sm:$0xff] %v108
  // Predicated region
  $region14: #{unet_up_block_forward.2} parent=0 // pred_check
    _
  $region15: #{unet_up_block_forward.2} parent=0 // pred_check_branch
    %114 = sbr.rel (0) target = $region17
  $region16: #{unet_up_block_forward.2} parent=0 // pred_region
    _
  $region17: #{unet_up_block_forward.2} parent=0 // pred_fallthru
    _
  // Predicated region
  $region18: #{unet_up_block_forward.2} parent=0 // pred_check
    _
  $region19: #{unet_up_block_forward.2} parent=0 // pred_check_branch
    %116 = sbr.rel (0) target = $region21
  $region20: #{unet_up_block_forward.2} parent=0 // pred_region
    _
  $region21: #{unet_up_block_forward.2} parent=0 // pred_fallthru
    _

// kernel: unet_up_block_forward.3
$region0: #{unet_up_block_forward.3}
  #allocation0 [shape = 'u32[]', space=smem, size = 0x4, offset = 0x4, fixed_abs, tag = 'smem constant byte address 0x4 - core index']
  #allocation1 [shape = 'u32[144,128]{1,0:T(1,128)}', space=vmem, size = 0x12000, scoped, tag = 'internal scratch']
  #allocation2 [shape = 'f32[72,512]{1,0:T(8,128)}', space=vmem, size = 0x24000, scoped, tag = 'scratch operand']
  #allocation3 [shape = 'f32[36,512]{1,0:T(8,128)}', space=vmem, size = 0x14000, scoped, tag = 'scratch operand']
  %s0 = inlined_call_operand.vmem [shape: f32[4,512], index: 0, kind: input, shape index: {}]
  %s1 = inlined_call_operand.vmem [shape: f32[4,512], index: 1, kind: input, shape index: {}]
  %s2 = inlined_call_operand.vmem [shape: f32[9,512], index: 2, kind: input, shape index: {}]
  %s3 = inlined_call_operand.vmem [shape: f32[4,72], index: 3, kind: input, shape index: {}]
  %s4 = inlined_call_operand.vmem [shape: f32[4,36], index: 4, kind: input, shape index: {}]
  %s5 = inlined_call_operand.vmem [shape: f32[4,36], index: 5, kind: input, shape index: {}]
  %s6 = inlined_call_operand.vmem [shape: f32[4,1], index: 6, kind: input, shape index: {}]
  %s7 = inlined_call_operand.vmem [shape: f32[4,1], index: 7, kind: input, shape index: {}]
  %s8 = inlined_call_operand.vmem [shape: f32[4,1], index: 8, kind: input, shape index: {}]
  %s9 = inlined_call_operand.vmem [shape: f32[4,1], index: 9, kind: input, shape index: {}]
  %s10 = inlined_call_operand.vmem [shape: f32[4,1], index: 10, kind: input, shape index: {}]
  %s11 = inlined_call_operand.vmem [shape: f32[4,1], index: 11, kind: input, shape index: {}]
  %s12 = inlined_call_operand.vmem [shape: f32[4,512], index: 12, kind: output, shape index: {}]
  %s13 = sld [smem:[#allocation0]]
  $region58: #{unet_up_block_forward.3} parent=0
    _
  %s15 = ssub.s32 1, %s13
  %s16 = scalar_select 0, %s15, %s13
  // Predicated region
  $region2: #{unet_up_block_forward.3} parent=0 // pred_check
    _
  $region3: #{unet_up_block_forward.3} parent=0 // pred_check_branch
    %18 = sbr.rel (0) target = $region5
  $region4: #{unet_up_block_forward.3} parent=0 // pred_region
    _
  $region5: #{unet_up_block_forward.3} parent=0 // pred_fallthru
    _
  // Predicated region
  $region6: #{unet_up_block_forward.3} parent=0 // pred_check
    _
  $region7: #{unet_up_block_forward.3} parent=0 // pred_check_branch
    %20 = sbr.rel (0) target = $region9
  $region8: #{unet_up_block_forward.3} parent=0 // pred_region
    _
  $region9: #{unet_up_block_forward.3} parent=0 // pred_fallthru
    _
  // Predicated region
  $region10: #{unet_up_block_forward.3} parent=0 // pred_check
    _
  $region11: #{unet_up_block_forward.3} parent=0 // pred_check_branch
    %22 = sbr.rel (0) target = $region13
  $region12: #{unet_up_block_forward.3} parent=0 // pred_region
    _
  $region13: #{unet_up_block_forward.3} parent=0 // pred_fallthru
    _
  // Predicated region
  $region14: #{unet_up_block_forward.3} parent=0 // pred_check
    _
  $region15: #{unet_up_block_forward.3} parent=0 // pred_check_branch
    %24 = sbr.rel (0) target = $region17
  $region16: #{unet_up_block_forward.3} parent=0 // pred_region
    _
  $region17: #{unet_up_block_forward.3} parent=0 // pred_fallthru
    _
  // Predicated region
  $region18: #{unet_up_block_forward.3} parent=0 // pred_check
    _
  $region19: #{unet_up_block_forward.3} parent=0 // pred_check_branch
    %26 = sbr.rel (0) target = $region21
  $region20: #{unet_up_block_forward.3} parent=0 // pred_region
    _
  $region21: #{unet_up_block_forward.3} parent=0 // pred_fallthru
    _
  // Predicated region
  $region22: #{unet_up_block_forward.3} parent=0 // pred_check
    _
  $region23: #{unet_up_block_forward.3} parent=0 // pred_check_branch
    %28 = sbr.rel (0) target = $region25
  $region24: #{unet_up_block_forward.3} parent=0 // pred_region
    _
  $region25: #{unet_up_block_forward.3} parent=0 // pred_fallthru
    _
  // Predicated region
  $region26: #{unet_up_block_forward.3} parent=0 // pred_check
    _
  $region27: #{unet_up_block_forward.3} parent=0 // pred_check_branch
    %30 = sbr.rel (0) target = $region29
  $region28: #{unet_up_block_forward.3} parent=0 // pred_region
    _
  $region29: #{unet_up_block_forward.3} parent=0 // pred_fallthru
    _
  // Predicated region
  $region30: #{unet_up_block_forward.3} parent=0 // pred_check
    _
  $region31: #{unet_up_block_forward.3} parent=0 // pred_check_branch
    %32 = sbr.rel (0) target = $region33
  $region32: #{unet_up_block_forward.3} parent=0 // pred_region
    _
  $region33: #{unet_up_block_forward.3} parent=0 // pred_fallthru
    _
  // Predicated region
  $region34: #{unet_up_block_forward.3} parent=0 // pred_check
    _
  $region35: #{unet_up_block_forward.3} parent=0 // pred_check_branch
    %34 = sbr.rel (0) target = $region37
  $region36: #{unet_up_block_forward.3} parent=0 // pred_region
    _
  $region37: #{unet_up_block_forward.3} parent=0 // pred_fallthru
    _
  // Predicated region
  $region38: #{unet_up_block_forward.3} parent=0 // pred_check
    _
  $region39: #{unet_up_block_forward.3} parent=0 // pred_check_branch
    %36 = sbr.rel (0) target = $region41
  $region40: #{unet_up_block_forward.3} parent=0 // pred_region
    _
  $region41: #{unet_up_block_forward.3} parent=0 // pred_fallthru
    _
  // Predicated region
  $region42: #{unet_up_block_forward.3} parent=0 // pred_check
    _
  $region43: #{unet_up_block_forward.3} parent=0 // pred_check_branch
    %38 = sbr.rel (0) target = $region45
  $region44: #{unet_up_block_forward.3} parent=0 // pred_region
    _
  $region45: #{unet_up_block_forward.3} parent=0 // pred_fallthru
    _
  // Predicated region
  $region46: #{unet_up_block_forward.3} parent=0 // pred_check
    _
  $region47: #{unet_up_block_forward.3} parent=0 // pred_check_branch
    %40 = sbr.rel (0) target = $region49
  $region48: #{unet_up_block_forward.3} parent=0 // pred_region
    _
  $region49: #{unet_up_block_forward.3} parent=0 // pred_fallthru
    _
  %v41 = vld [vmem:[%s2] sm:$0xff]
  %v42 = vld [vmem:[%s2 + $0x8] sm:$0xff]
  %v43 = vld [vmem:[%s2 + $0x10] sm:$0xff]
  %v44 = vld [vmem:[%s2 + $0x18] sm:$0xff]
  %v45 = vld [vmem:[%s2 + $0x20] sm:$0x1]
  %v46 = vld [vmem:[%s2 + $0x28] sm:$0x1]
  %v47 = vld [vmem:[%s2 + $0x30] sm:$0x1]
  %v48 = vld [vmem:[%s2 + $0x38] sm:$0x1]
  %49 = vst [vmem:[#allocation2] sm:$0xff] 0.0
  %50 = vst [vmem:[#allocation2 + $0x8] sm:$0xff] 0.0
  %51 = vst [vmem:[#allocation2 + $0x10] sm:$0xff] 0.0
  %52 = vst [vmem:[#allocation2 + $0x18] sm:$0xff] 0.0
  %53 = vst [vmem:[#allocation2 + $0x20] sm:$0xff] 0.0
  %54 = vst [vmem:[#allocation2 + $0x28] sm:$0xff] 0.0
  %55 = vst [vmem:[#allocation2 + $0x30] sm:$0xff] 0.0
  %56 = vst [vmem:[#allocation2 + $0x38] sm:$0xff] 0.0
  %57 = vst [vmem:[#allocation2 + $0x40] sm:$0xff] 0.0
  %58 = vst [vmem:[#allocation2 + $0x48] sm:$0xff] 0.0
  %59 = vst [vmem:[#allocation2 + $0x50] sm:$0xff] 0.0
  %60 = vst [vmem:[#allocation2 + $0x58] sm:$0xff] 0.0
  %61 = vst [vmem:[#allocation2 + $0x60] sm:$0xff] 0.0
  %62 = vst [vmem:[#allocation2 + $0x68] sm:$0xff] 0.0
  %63 = vst [vmem:[#allocation2 + $0x70] sm:$0xff] 0.0
  %64 = vst [vmem:[#allocation2 + $0x78] sm:$0xff] 0.0
  %65 = vst [vmem:[#allocation2 + $0x80] sm:$0xff] 0.0
  %66 = vst [vmem:[#allocation2 + $0x88] sm:$0xff] 0.0
  %67 = vst [vmem:[#allocation2 + $0x90] sm:$0xff] 0.0
  %68 = vst [vmem:[#allocation2 + $0x98] sm:$0xff] 0.0
  %69 = vst [vmem:[#allocation2 + $0xa0] sm:$0xff] 0.0
  %70 = vst [vmem:[#allocation2 + $0xa8] sm:$0xff] 0.0
  %71 = vst [vmem:[#allocation2 + $0xb0] sm:$0xff] 0.0
  %72 = vst [vmem:[#allocation2 + $0xb8] sm:$0xff] 0.0
  %73 = vst [vmem:[#allocation2 + $0xc0] sm:$0xff] 0.0
  %74 = vst [vmem:[#allocation2 + $0xc8] sm:$0xff] 0.0
  %75 = vst [vmem:[#allocation2 + $0xd0] sm:$0xff] 0.0
  %76 = vst [vmem:[#allocation2 + $0xd8] sm:$0xff] 0.0
  %77 = vst [vmem:[#allocation2 + $0xe0] sm:$0xff] 0.0
  %78 = vst [vmem:[#allocation2 + $0xe8] sm:$0xff] 0.0
  %79 = vst [vmem:[#allocation2 + $0xf0] sm:$0xff] 0.0
  %80 = vst [vmem:[#allocation2 + $0xf8] sm:$0xff] 0.0
  %81 = vst [vmem:[#allocation2 + $0x100] sm:$0xff] 0.0
  %82 = vst [vmem:[#allocation2 + $0x108] sm:$0xff] 0.0
  %83 = vst [vmem:[#allocation2 + $0x110] sm:$0xff] 0.0
  %84 = vst [vmem:[#allocation2 + $0x118] sm:$0xff] 0.0
  %85 = vst [vmem:[#allocation3] sm:$0xff] 0.0
  %86 = vst [vmem:[#allocation3 + $0x8] sm:$0xff] 0.0
  %87 = vst [vmem:[#allocation3 + $0x10] sm:$0xff] 0.0
  %88 = vst [vmem:[#allocation3 + $0x18] sm:$0xff] 0.0
  %89 = vst [vmem:[#allocation3 + $0x20] sm:$0xff] 0.0
  %90 = vst [vmem:[#allocation3 + $0x28] sm:$0xff] 0.0
  %91 = vst [vmem:[#allocation3 + $0x30] sm:$0xff] 0.0
  %92 = vst [vmem:[#allocation3 + $0x38] sm:$0xff] 0.0
  %93 = vst [vmem:[#allocation3 + $0x40] sm:$0xff] 0.0
  %94 = vst [vmem:[#allocation3 + $0x48] sm:$0xff] 0.0
  %95 = vst [vmem:[#allocation3 + $0x50] sm:$0xff] 0.0
  %96 = vst [vmem:[#allocation3 + $0x58] sm:$0xff] 0.0
  %97 = vst [vmem:[#allocation3 + $0x60] sm:$0xff] 0.0
  %98 = vst [vmem:[#allocation3 + $0x68] sm:$0xff] 0.0
  %99 = vst [vmem:[#allocation3 + $0x70] sm:$0xff] 0.0
  %100 = vst [vmem:[#allocation3 + $0x78] sm:$0xff] 0.0
  %101 = vst [vmem:[#allocation3 + $0x80] sm:$0xf] 0.0
  %102 = vst [vmem:[#allocation3 + $0x88] sm:$0xf] 0.0
  %103 = vst [vmem:[#allocation3 + $0x90] sm:$0xf] 0.0
  %104 = vst [vmem:[#allocation3 + $0x98] sm:$0xf] 0.0
  %v105 = vld [vmem:[%s0] sm:$0xff]
  %v106 = vld [vmem:[%s0 + $0x8] sm:$0xff]
  %v107 = vld [vmem:[%s1] sm:$0xff]
  %v108 = vld [vmem:[%s1 + $0x8] sm:$0xff]
  %v109 = vlaneseq
  %v110 = vshrl.u32 %v109, 7
  %v111 = vsub.s32 0, %v110
  %v112 = vrot.slane %v41, %v111
  %v113 = vlaneseq
  %v114 = vshrl.u32 %v113, 7
  %v115 = vsub.s32 0, %v114
  %v116 = vrot.slane %v42, %v115
  %v117 = vlaneseq
  %v118 = vshrl.u32 %v117, 7
  %v119 = vsub.s32 0, %v118
  %v120 = vrot.slane %v43, %v119
  %v121 = vlaneseq
  %v122 = vshrl.u32 %v121, 7
  %v123 = vsub.s32 0, %v122
  %v124 = vrot.slane %v44, %v123
  %v129 = vcombine.low %v112, %v116
  %v130 = vcombine.low %v120, %v124
  %131 = vrot.lane.b32.xlu0 %v129, 111
  %v132 = vpop.permute.xlu0 %131
  %133 = vrot.lane.b32.xlu0 %v130, 111
  %v134 = vpop.permute.xlu0 %133
  %v135 = vrot.slane %v132, 4
  %v136 = vrot.slane %v134, 4
  %vm137 = vcmask 1043456
  %v138 = vsel %vm137, %v135, %v136
  %vm139 = vcmask 908288
  %v140 = vsel %vm139, %v132, %v138
  %v141 = vsel %vm139, %v134, %v136
  %v144 = vmul.f32 %v105, %v140
  %v145 = vmul.f32 %v106, %v141
  %v148 = vcombine.high %v144, %v144
  %v149 = vcombine.high %v145, %v145
  %150 = vrot.lane.b32.xlu0 %v144, 17
  %v151 = vpop.permute.xlu0 %150
  %152 = vrot.lane.b32.xlu0 %v148, 17
  %v153 = vpop.permute.xlu0 %152
  %154 = vrot.lane.b32.xlu0 %v145, 17
  %v155 = vpop.permute.xlu0 %154
  %156 = vrot.lane.b32.xlu0 %v149, 17
  %v157 = vpop.permute.xlu0 %156
  %vm158 = vcmask 138240
  %v159 = vsel %vm158, %v151, %v153
  %v160 = vsel %vm158, %v153, %v155
  %v161 = vsel %vm158, %v155, %v157
  %vm166 = vcmask 1043592
  %167 = vst.msk [vmem:[#allocation2] sm:$0xf] %vm166, %v151
  %168 = vst [vmem:[#allocation2 + $0x8] sm:$0xf] %v159
  %169 = vst [vmem:[#allocation2 + $0x10] sm:$0xf] %v160
  %170 = vst [vmem:[#allocation2 + $0x18] sm:$0xf] %v161
  %v171 = vmul.f32 %v107, %v140
  %v172 = vmul.f32 %v108, %v141
  %v175 = vcombine.low %v171, %v171
  %v176 = vcombine.low %v172, %v172
  %177 = vrot.lane.b32.xlu0 %v175, 17
  %v178 = vpop.permute.xlu0 %177
  %179 = vrot.lane.b32.xlu0 %v171, 17
  %v180 = vpop.permute.xlu0 %179
  %181 = vrot.lane.b32.xlu0 %v176, 17
  %v182 = vpop.permute.xlu0 %181
  %183 = vrot.lane.b32.xlu0 %v172, 17
  %v184 = vpop.permute.xlu0 %183
  %v185 = vsel %vm158, %v178, %v180
  %v186 = vsel %vm158, %v180, %v182
  %v187 = vsel %vm158, %v182, %v184
  %vm192 = vcmask 1047692
  %193 = vst.msk [vmem:[#allocation2] sm:$0xf0] %vm192, %v178
  %194 = vst [vmem:[#allocation2 + $0x8] sm:$0xf0] %v185
  %195 = vst [vmem:[#allocation2 + $0x10] sm:$0xf0] %v186
  %196 = vst [vmem:[#allocation2 + $0x18] sm:$0xf0] %v187
  %v197 = vlaneseq
  %v198 = vshrl.u32 %v197, 7
  %v199 = vsub.s32 1, %v198
  %v200 = vrot.slane %v41, %v199
  %v201 = vlaneseq
  %v202 = vshrl.u32 %v201, 7
  %v203 = vsub.s32 1, %v202
  %v204 = vrot.slane %v42, %v203
  %v205 = vlaneseq
  %v206 = vshrl.u32 %v205, 7
  %v207 = vsub.s32 1, %v206
  %v208 = vrot.slane %v43, %v207
  %v209 = vlaneseq
  %v210 = vshrl.u32 %v209, 7
  %v211 = vsub.s32 1, %v210
  %v212 = vrot.slane %v44, %v211
  %v217 = vcombine.low %v200, %v204
  %v218 = vcombine.low %v208, %v212
  %219 = vrot.lane.b32.xlu0 %v217, 112
  %v220 = vpop.permute.xlu0 %219
  %221 = vrot.lane.b32.xlu0 %v218, 112
  %v222 = vpop.permute.xlu0 %221
  %v223 = vrot.slane %v220, 4
  %v224 = vrot.slane %v222, 4
  %v225 = vsel %vm137, %v223, %v224
  %vm226 = vcmask 916480
  %v227 = vsel %vm226, %v220, %v225
  %v228 = vsel %vm226, %v222, %v224
  %v231 = vmul.f32 %v105, %v227
  %v232 = vmul.f32 %v106, %v228
  %v235 = vcombine.high %v231, %v231
  %v236 = vcombine.high %v232, %v232
  %237 = vrot.lane.b32.xlu0 %v231, 16
  %v238 = vpop.permute.xlu0 %237
  %239 = vrot.lane.b32.xlu0 %v235, 16
  %v240 = vpop.permute.xlu0 %239
  %241 = vrot.lane.b32.xlu0 %v232, 16
  %v242 = vpop.permute.xlu0 %241
  %243 = vrot.lane.b32.xlu0 %v236, 16
  %v244 = vpop.permute.xlu0 %243
  %vm245 = vcmask 130048
  %v246 = vsel %vm245, %v238, %v240
  %v247 = vsel %vm245, %v240, %v242
  %v248 = vsel %vm245, %v242, %v244
  %vm253 = vcmask 1043584
  %254 = vst.msk [vmem:[#allocation2 + $0x20] sm:$0xf] %vm253, %v238
  %255 = vst [vmem:[#allocation2 + $0x28] sm:$0xf] %v246
  %256 = vst [vmem:[#allocation2 + $0x30] sm:$0xf] %v247
  %257 = vst [vmem:[#allocation2 + $0x38] sm:$0xf] %v248
  %v258 = vmul.f32 %v107, %v227
  %v259 = vmul.f32 %v108, %v228
  %v262 = vcombine.low %v258, %v258
  %v263 = vcombine.low %v259, %v259
  %264 = vrot.lane.b32.xlu0 %v262, 16
  %v265 = vpop.permute.xlu0 %264
  %266 = vrot.lane.b32.xlu0 %v258, 16
  %v267 = vpop.permute.xlu0 %266
  %268 = vrot.lane.b32.xlu0 %v263, 16
  %v269 = vpop.permute.xlu0 %268
  %270 = vrot.lane.b32.xlu0 %v259, 16
  %v271 = vpop.permute.xlu0 %270
  %v272 = vsel %vm245, %v265, %v267
  %v273 = vsel %vm245, %v267, %v269
  %v274 = vsel %vm245, %v269, %v271
  %vm279 = vcmask 1047684
  %280 = vst.msk [vmem:[#allocation2 + $0x20] sm:$0xf0] %vm279, %v265
  %281 = vst [vmem:[#allocation2 + $0x28] sm:$0xf0] %v272
  %282 = vst [vmem:[#allocation2 + $0x30] sm:$0xf0] %v273
  %283 = vst [vmem:[#allocation2 + $0x38] sm:$0xf0] %v274
  %v284 = vlaneseq
  %v285 = vshrl.u32 %v284, 7
  %v286 = vsub.s32 2, %v285
  %v287 = vrot.slane %v41, %v286
  %v288 = vlaneseq
  %v289 = vshrl.u32 %v288, 7
  %v290 = vsub.s32 2, %v289
  %v291 = vrot.slane %v42, %v290
  %v292 = vlaneseq
  %v293 = vshrl.u32 %v292, 7
  %v294 = vsub.s32 2, %v293
  %v295 = vrot.slane %v43, %v294
  %v296 = vlaneseq
  %v297 = vshrl.u32 %v296, 7
  %v298 = vsub.s32 2, %v297
  %v299 = vrot.slane %v44, %v298
  %v304 = vcombine.low %v287, %v291
  %v305 = vcombine.low %v295, %v299
  %306 = vrot.lane.b32.xlu0 %v304, 113
  %v307 = vpop.permute.xlu0 %306
  %308 = vrot.lane.b32.xlu0 %v305, 113
  %v309 = vpop.permute.xlu0 %308
  %v310 = vrot.slane %v307, 4
  %v311 = vrot.slane %v309, 4
  %v312 = vsel %vm137, %v310, %v311
  %vm313 = vcmask 924672
  %v314 = vsel %vm313, %v307, %v312
  %v315 = vsel %vm313, %v309, %v311
  %v318 = vmul.f32 %v105, %v314
  %v319 = vmul.f32 %v106, %v315
  %v322 = vcombine.high %v318, %v318
  %v323 = vcombine.high %v319, %v319
  %324 = vrot.lane.b32.xlu0 %v318, 15
  %v325 = vpop.permute.xlu0 %324
  %326 = vrot.lane.b32.xlu0 %v322, 15
  %v327 = vpop.permute.xlu0 %326
  %328 = vrot.lane.b32.xlu0 %v319, 15
  %v329 = vpop.permute.xlu0 %328
  %330 = vrot.lane.b32.xlu0 %v323, 15
  %v331 = vpop.permute.xlu0 %330
  %vm332 = vcmask 121856
  %v333 = vsel %vm332, %v325, %v327
  %v334 = vsel %vm332, %v327, %v329
  %v335 = vsel %vm332, %v329, %v331
  %vm340 = vcmask 1043576
  %341 = vst.msk [vmem:[#allocation2 + $0x40] sm:$0xf] %vm340, %v325
  %342 = vst [vmem:[#allocation2 + $0x48] sm:$0xf] %v333
  %343 = vst [vmem:[#allocation2 + $0x50] sm:$0xf] %v334
  %344 = vst [vmem:[#allocation2 + $0x58] sm:$0xf] %v335
  %v345 = vmul.f32 %v107, %v314
  %v346 = vmul.f32 %v108, %v315
  %v349 = vcombine.low %v345, %v345
  %v350 = vcombine.low %v346, %v346
  %351 = vrot.lane.b32.xlu0 %v349, 15
  %v352 = vpop.permute.xlu0 %351
  %353 = vrot.lane.b32.xlu0 %v345, 15
  %v354 = vpop.permute.xlu0 %353
  %355 = vrot.lane.b32.xlu0 %v350, 15
  %v356 = vpop.permute.xlu0 %355
  %357 = vrot.lane.b32.xlu0 %v346, 15
  %v358 = vpop.permute.xlu0 %357
  %v359 = vsel %vm332, %v352, %v354
  %v360 = vsel %vm332, %v354, %v356
  %v361 = vsel %vm332, %v356, %v358
  %vm366 = vcmask 1047676
  %367 = vst.msk [vmem:[#allocation2 + $0x40] sm:$0xf0] %vm366, %v352
  %368 = vst [vmem:[#allocation2 + $0x48] sm:$0xf0] %v359
  %369 = vst [vmem:[#allocation2 + $0x50] sm:$0xf0] %v360
  %370 = vst [vmem:[#allocation2 + $0x58] sm:$0xf0] %v361
  %v371 = vlaneseq
  %v372 = vshrl.u32 %v371, 7
  %v373 = vsub.s32 3, %v372
  %v374 = vrot.slane %v41, %v373
  %v375 = vlaneseq
  %v376 = vshrl.u32 %v375, 7
  %v377 = vsub.s32 3, %v376
  %v378 = vrot.slane %v42, %v377
  %v379 = vlaneseq
  %v380 = vshrl.u32 %v379, 7
  %v381 = vsub.s32 3, %v380
  %v382 = vrot.slane %v43, %v381
  %v383 = vlaneseq
  %v384 = vshrl.u32 %v383, 7
  %v385 = vsub.s32 3, %v384
  %v386 = vrot.slane %v44, %v385
  %v391 = vcombine.low %v374, %v378
  %v392 = vcombine.low %v382, %v386
  %393 = vrot.lane.b32.xlu0 %v391, 127
  %v394 = vpop.permute.xlu0 %393
  %395 = vrot.lane.b32.xlu0 %v392, 127
  %v396 = vpop.permute.xlu0 %395
  %v397 = vrot.slane %v394, 4
  %v398 = vrot.slane %v396, 4
  %v399 = vsel %vm137, %v397, %v398
  %vm400 = vcmask 1039360
  %v401 = vsel %vm400, %v394, %v399
  %v402 = vsel %vm400, %v396, %v398
  %v405 = vmul.f32 %v105, %v401
  %v406 = vmul.f32 %v106, %v402
  %v409 = vcombine.high %v405, %v405
  %v410 = vcombine.high %v406, %v406
  %411 = vrot.lane.b32.xlu0 %v405, 1
  %v412 = vpop.permute.xlu0 %411
  %413 = vrot.lane.b32.xlu0 %v409, 1
  %v414 = vpop.permute.xlu0 %413
  %415 = vrot.lane.b32.xlu0 %v406, 1
  %v416 = vpop.permute.xlu0 %415
  %417 = vrot.lane.b32.xlu0 %v410, 1
  %v418 = vpop.permute.xlu0 %417
  %vm419 = vcmask 7168
  %v420 = vsel %vm419, %v412, %v414
  %v421 = vsel %vm419, %v414, %v416
  %v422 = vsel %vm419, %v416, %v418
  %vm427 = vcmask 1043464
  %428 = vst.msk [vmem:[#allocation2 + $0x60] sm:$0xf] %vm427, %v412
  %429 = vst [vmem:[#allocation2 + $0x68] sm:$0xf] %v420
  %430 = vst [vmem:[#allocation2 + $0x70] sm:$0xf] %v421
  %431 = vst [vmem:[#allocation2 + $0x78] sm:$0xf] %v422
  %v432 = vmul.f32 %v107, %v401
  %v433 = vmul.f32 %v108, %v402
  %v436 = vcombine.low %v432, %v432
  %v437 = vcombine.low %v433, %v433
  %438 = vrot.lane.b32.xlu0 %v436, 1
  %v439 = vpop.permute.xlu0 %438
  %440 = vrot.lane.b32.xlu0 %v432, 1
  %v441 = vpop.permute.xlu0 %440
  %442 = vrot.lane.b32.xlu0 %v437, 1
  %v443 = vpop.permute.xlu0 %442
  %444 = vrot.lane.b32.xlu0 %v433, 1
  %v445 = vpop.permute.xlu0 %444
  %v446 = vsel %vm419, %v439, %v441
  %v447 = vsel %vm419, %v441, %v443
  %v448 = vsel %vm419, %v443, %v445
  %vm453 = vcmask 1047564
  %454 = vst.msk [vmem:[#allocation2 + $0x60] sm:$0xf0] %vm453, %v439
  %455 = vst [vmem:[#allocation2 + $0x68] sm:$0xf0] %v446
  %456 = vst [vmem:[#allocation2 + $0x70] sm:$0xf0] %v447
  %457 = vst [vmem:[#allocation2 + $0x78] sm:$0xf0] %v448
  %v460 = vcombine.high %v105, %v105
  %v461 = vcombine.high %v106, %v106
  %464 = vst [vmem:[#allocation2 + $0x80] sm:$0xf] %v105
  %465 = vst [vmem:[#allocation2 + $0x88] sm:$0xf] %v460
  %466 = vst [vmem:[#allocation2 + $0x90] sm:$0xf] %v106
  %467 = vst [vmem:[#allocation2 + $0x98] sm:$0xf] %v461
  %v470 = vcombine.low %v107, %v107
  %v471 = vcombine.low %v108, %v108
  %474 = vst [vmem:[#allocation2 + $0x80] sm:$0xf0] %v470
  %475 = vst [vmem:[#allocation2 + $0x88] sm:$0xf0] %v107
  %476 = vst [vmem:[#allocation2 + $0x90] sm:$0xf0] %v471
  %477 = vst [vmem:[#allocation2 + $0x98] sm:$0xf0] %v108
  %v478 = vlaneseq
  %v479 = vshrl.u32 %v478, 7
  %v480 = vsub.s32 5, %v479
  %v481 = vrot.slane %v41, %v480
  %v482 = vlaneseq
  %v483 = vshrl.u32 %v482, 7
  %v484 = vsub.s32 5, %v483
  %v485 = vrot.slane %v42, %v484
  %v486 = vlaneseq
  %v487 = vshrl.u32 %v486, 7
  %v488 = vsub.s32 5, %v487
  %v489 = vrot.slane %v43, %v488
  %v490 = vlaneseq
  %v491 = vshrl.u32 %v490, 7
  %v492 = vsub.s32 5, %v491
  %v493 = vrot.slane %v44, %v492
  %v498 = vcombine.low %v481, %v485
  %v499 = vcombine.low %v489, %v493
  %500 = vrot.lane.b32.xlu0 %v498, 1
  %v501 = vpop.permute.xlu0 %500
  %502 = vrot.lane.b32.xlu0 %v499, 1
  %v503 = vpop.permute.xlu0 %502
  %v504 = vrot.slane %v501, 4
  %v505 = vrot.slane %v503, 4
  %v506 = vsel %vm419, %v504, %v501
  %v507 = vsel %vm137, %v504, %v505
  %v508 = vsel %vm419, %v507, %v503
  %v511 = vmul.f32 %v105, %v506
  %v512 = vmul.f32 %v106, %v508
  %v515 = vcombine.high %v511, %v511
  %v516 = vcombine.high %v512, %v512
  %517 = vrot.lane.b32.xlu0 %v511, 127
  %v518 = vpop.permute.xlu0 %517
  %519 = vrot.lane.b32.xlu0 %v515, 127
  %v520 = vpop.permute.xlu0 %519
  %521 = vrot.lane.b32.xlu0 %v512, 127
  %v522 = vpop.permute.xlu0 %521
  %523 = vrot.lane.b32.xlu0 %v516, 127
  %v524 = vpop.permute.xlu0 %523
  %v525 = vsel %vm400, %v518, %v520
  %v526 = vsel %vm400, %v520, %v522
  %v527 = vsel %vm400, %v522, %v524
  %532 = vst [vmem:[#allocation2 + $0xa0] sm:$0xf] %v525
  %533 = vst [vmem:[#allocation2 + $0xa8] sm:$0xf] %v526
  %534 = vst [vmem:[#allocation2 + $0xb0] sm:$0xf] %v527
  %vm535 = vcmask 1035264
  %536 = vst.msk [vmem:[#allocation2 + $0xb8] sm:$0xf] %vm535, %v524
  %v537 = vmul.f32 %v107, %v506
  %v538 = vmul.f32 %v108, %v508
  %v541 = vcombine.low %v537, %v537
  %v542 = vcombine.low %v538, %v538
  %543 = vrot.lane.b32.xlu0 %v541, 127
  %v544 = vpop.permute.xlu0 %543
  %545 = vrot.lane.b32.xlu0 %v537, 127
  %v546 = vpop.permute.xlu0 %545
  %547 = vrot.lane.b32.xlu0 %v542, 127
  %v548 = vpop.permute.xlu0 %547
  %549 = vrot.lane.b32.xlu0 %v538, 127
  %v550 = vpop.permute.xlu0 %549
  %v551 = vsel %vm400, %v544, %v546
  %v552 = vsel %vm400, %v546, %v548
  %v553 = vsel %vm400, %v548, %v550
  %558 = vst [vmem:[#allocation2 + $0xa0] sm:$0xf0] %v551
  %559 = vst [vmem:[#allocation2 + $0xa8] sm:$0xf0] %v552
  %560 = vst [vmem:[#allocation2 + $0xb0] sm:$0xf0] %v553
  %vm561 = vcmask 1039364
  %562 = vst.msk [vmem:[#allocation2 + $0xb8] sm:$0xf0] %vm561, %v550
  %v563 = vlaneseq
  %v564 = vshrl.u32 %v563, 7
  %v565 = vsub.s32 6, %v564
  %v566 = vrot.slane %v41, %v565
  %v567 = vlaneseq
  %v568 = vshrl.u32 %v567, 7
  %v569 = vsub.s32 6, %v568
  %v570 = vrot.slane %v42, %v569
  %v571 = vlaneseq
  %v572 = vshrl.u32 %v571, 7
  %v573 = vsub.s32 6, %v572
  %v574 = vrot.slane %v43, %v573
  %v575 = vlaneseq
  %v576 = vshrl.u32 %v575, 7
  %v577 = vsub.s32 6, %v576
  %v578 = vrot.slane %v44, %v577
  %v583 = vcombine.low %v566, %v570
  %v584 = vcombine.low %v574, %v578
  %585 = vrot.lane.b32.xlu0 %v583, 15
  %v586 = vpop.permute.xlu0 %585
  %587 = vrot.lane.b32.xlu0 %v584, 15
  %v588 = vpop.permute.xlu0 %587
  %v589 = vrot.slane %v586, 4
  %v590 = vrot.slane %v588, 4
  %v591 = vsel %vm332, %v589, %v586
  %v592 = vsel %vm137, %v589, %v590
  %v593 = vsel %vm332, %v592, %v588
  %v596 = vmul.f32 %v105, %v591
  %v597 = vmul.f32 %v106, %v593
  %v600 = vcombine.high %v596, %v596
  %v601 = vcombine.high %v597, %v597
  %602 = vrot.lane.b32.xlu0 %v596, 113
  %v603 = vpop.permute.xlu0 %602
  %604 = vrot.lane.b32.xlu0 %v600, 113
  %v605 = vpop.permute.xlu0 %604
  %606 = vrot.lane.b32.xlu0 %v597, 113
  %v607 = vpop.permute.xlu0 %606
  %608 = vrot.lane.b32.xlu0 %v601, 113
  %v609 = vpop.permute.xlu0 %608
  %v610 = vsel %vm313, %v603, %v605
  %v611 = vsel %vm313, %v605, %v607
  %v612 = vsel %vm313, %v607, %v609
  %617 = vst [vmem:[#allocation2 + $0xc0] sm:$0xf] %v610
  %618 = vst [vmem:[#allocation2 + $0xc8] sm:$0xf] %v611
  %619 = vst [vmem:[#allocation2 + $0xd0] sm:$0xf] %v612
  %vm620 = vcmask 920576
  %621 = vst.msk [vmem:[#allocation2 + $0xd8] sm:$0xf] %vm620, %v609
  %v622 = vmul.f32 %v107, %v591
  %v623 = vmul.f32 %v108, %v593
  %v626 = vcombine.low %v622, %v622
  %v627 = vcombine.low %v623, %v623
  %628 = vrot.lane.b32.xlu0 %v626, 113
  %v629 = vpop.permute.xlu0 %628
  %630 = vrot.lane.b32.xlu0 %v622, 113
  %v631 = vpop.permute.xlu0 %630
  %632 = vrot.lane.b32.xlu0 %v627, 113
  %v633 = vpop.permute.xlu0 %632
  %634 = vrot.lane.b32.xlu0 %v623, 113
  %v635 = vpop.permute.xlu0 %634
  %v636 = vsel %vm313, %v629, %v631
  %v637 = vsel %vm313, %v631, %v633
  %v638 = vsel %vm313, %v633, %v635
  %643 = vst [vmem:[#allocation2 + $0xc0] sm:$0xf0] %v636
  %644 = vst [vmem:[#allocation2 + $0xc8] sm:$0xf0] %v637
  %645 = vst [vmem:[#allocation2 + $0xd0] sm:$0xf0] %v638
  %vm646 = vcmask 924676
  %647 = vst.msk [vmem:[#allocation2 + $0xd8] sm:$0xf0] %vm646, %v635
  %v648 = vlaneseq
  %v649 = vshrl.u32 %v648, 7
  %v650 = vsub.s32 7, %v649
  %v651 = vrot.slane %v41, %v650
  %v652 = vlaneseq
  %v653 = vshrl.u32 %v652, 7
  %v654 = vsub.s32 7, %v653
  %v655 = vrot.slane %v42, %v654
  %v656 = vlaneseq
  %v657 = vshrl.u32 %v656, 7
  %v658 = vsub.s32 7, %v657
  %v659 = vrot.slane %v43, %v658
  %v660 = vlaneseq
  %v661 = vshrl.u32 %v660, 7
  %v662 = vsub.s32 7, %v661
  %v663 = vrot.slane %v44, %v662
  %v668 = vcombine.low %v651, %v655
  %v669 = vcombine.low %v659, %v663
  %670 = vrot.lane.b32.xlu0 %v668, 16
  %v671 = vpop.permute.xlu0 %670
  %672 = vrot.lane.b32.xlu0 %v669, 16
  %v673 = vpop.permute.xlu0 %672
  %v674 = vrot.slane %v671, 4
  %v675 = vrot.slane %v673, 4
  %v676 = vsel %vm245, %v674, %v671
  %v677 = vsel %vm137, %v674, %v675
  %v678 = vsel %vm245, %v677, %v673
  %v681 = vmul.f32 %v105, %v676
  %v682 = vmul.f32 %v106, %v678
  %v685 = vcombine.high %v681, %v681
  %v686 = vcombine.high %v682, %v682
  %687 = vrot.lane.b32.xlu0 %v681, 112
  %v688 = vpop.permute.xlu0 %687
  %689 = vrot.lane.b32.xlu0 %v685, 112
  %v690 = vpop.permute.xlu0 %689
  %691 = vrot.lane.b32.xlu0 %v682, 112
  %v692 = vpop.permute.xlu0 %691
  %693 = vrot.lane.b32.xlu0 %v686, 112
  %v694 = vpop.permute.xlu0 %693
  %v695 = vsel %vm226, %v688, %v690
  %v696 = vsel %vm226, %v690, %v692
  %v697 = vsel %vm226, %v692, %v694
  %702 = vst [vmem:[#allocation2 + $0xe0] sm:$0xf] %v695
  %703 = vst [vmem:[#allocation2 + $0xe8] sm:$0xf] %v696
  %704 = vst [vmem:[#allocation2 + $0xf0] sm:$0xf] %v697
  %vm705 = vcmask 912384
  %706 = vst.msk [vmem:[#allocation2 + $0xf8] sm:$0xf] %vm705, %v694
  %v707 = vmul.f32 %v107, %v676
  %v708 = vmul.f32 %v108, %v678
  %v711 = vcombine.low %v707, %v707
  %v712 = vcombine.low %v708, %v708
  %713 = vrot.lane.b32.xlu0 %v711, 112
  %v714 = vpop.permute.xlu0 %713
  %715 = vrot.lane.b32.xlu0 %v707, 112
  %v716 = vpop.permute.xlu0 %715
  %717 = vrot.lane.b32.xlu0 %v712, 112
  %v718 = vpop.permute.xlu0 %717
  %719 = vrot.lane.b32.xlu0 %v708, 112
  %v720 = vpop.permute.xlu0 %719
  %v721 = vsel %vm226, %v714, %v716
  %v722 = vsel %vm226, %v716, %v718
  %v723 = vsel %vm226, %v718, %v720
  %728 = vst [vmem:[#allocation2 + $0xe0] sm:$0xf0] %v721
  %729 = vst [vmem:[#allocation2 + $0xe8] sm:$0xf0] %v722
  %730 = vst [vmem:[#allocation2 + $0xf0] sm:$0xf0] %v723
  %vm731 = vcmask 916484
  %732 = vst.msk [vmem:[#allocation2 + $0xf8] sm:$0xf0] %vm731, %v720
  %v733 = vlaneseq
  %v734 = vshrl.u32 %v733, 7
  %v735 = vsub.s32 0, %v734
  %v736 = vrot.slane %v45, %v735
  %v737 = vlaneseq
  %v738 = vshrl.u32 %v737, 7
  %v739 = vsub.s32 0, %v738
  %v740 = vrot.slane %v46, %v739
  %v741 = vlaneseq
  %v742 = vshrl.u32 %v741, 7
  %v743 = vsub.s32 0, %v742
  %v744 = vrot.slane %v47, %v743
  %v745 = vlaneseq
  %v746 = vshrl.u32 %v745, 7
  %v747 = vsub.s32 0, %v746
  %v748 = vrot.slane %v48, %v747
  %v753 = vcombine.low %v736, %v740
  %v754 = vcombine.low %v744, %v748
  %755 = vrot.lane.b32.xlu0 %v753, 17
  %v756 = vpop.permute.xlu0 %755
  %757 = vrot.lane.b32.xlu0 %v754, 17
  %v758 = vpop.permute.xlu0 %757
  %v759 = vrot.slane %v756, 4
  %v760 = vrot.slane %v758, 4
  %v761 = vsel %vm158, %v759, %v756
  %v762 = vsel %vm137, %v759, %v760
  %v763 = vsel %vm158, %v762, %v758
  %v766 = vmul.f32 %v105, %v761
  %v767 = vmul.f32 %v106, %v763
  %v770 = vcombine.high %v766, %v766
  %v771 = vcombine.high %v767, %v767
  %772 = vrot.lane.b32.xlu0 %v766, 111
  %v773 = vpop.permute.xlu0 %772
  %774 = vrot.lane.b32.xlu0 %v770, 111
  %v775 = vpop.permute.xlu0 %774
  %776 = vrot.lane.b32.xlu0 %v767, 111
  %v777 = vpop.permute.xlu0 %776
  %778 = vrot.lane.b32.xlu0 %v771, 111
  %v779 = vpop.permute.xlu0 %778
  %v780 = vsel %vm139, %v773, %v775
  %v781 = vsel %vm139, %v775, %v777
  %v782 = vsel %vm139, %v777, %v779
  %787 = vst [vmem:[#allocation2 + $0x100] sm:$0xf] %v780
  %788 = vst [vmem:[#allocation2 + $0x108] sm:$0xf] %v781
  %789 = vst [vmem:[#allocation2 + $0x110] sm:$0xf] %v782
  %vm790 = vcmask 904192
  %791 = vst.msk [vmem:[#allocation2 + $0x118] sm:$0xf] %vm790, %v779
  %v792 = vmul.f32 %v107, %v761
  %v793 = vmul.f32 %v108, %v763
  %v796 = vcombine.low %v792, %v792
  %v797 = vcombine.low %v793, %v793
  %798 = vrot.lane.b32.xlu0 %v796, 111
  %v799 = vpop.permute.xlu0 %798
  %800 = vrot.lane.b32.xlu0 %v792, 111
  %v801 = vpop.permute.xlu0 %800
  %802 = vrot.lane.b32.xlu0 %v797, 111
  %v803 = vpop.permute.xlu0 %802
  %804 = vrot.lane.b32.xlu0 %v793, 111
  %v805 = vpop.permute.xlu0 %804
  %v806 = vsel %vm139, %v799, %v801
  %v807 = vsel %vm139, %v801, %v803
  %v808 = vsel %vm139, %v803, %v805
  %813 = vst [vmem:[#allocation2 + $0x100] sm:$0xf0] %v806
  %814 = vst [vmem:[#allocation2 + $0x108] sm:$0xf0] %v807
  %815 = vst [vmem:[#allocation2 + $0x110] sm:$0xf0] %v808
  %vm816 = vcmask 908292
  %817 = vst.msk [vmem:[#allocation2 + $0x118] sm:$0xf0] %vm816, %v805
  %v818 = vld [vmem:[%s3] sm:$0xf]
  %v819 = vld [vmem:[#allocation2] sm:$0xff]
  %v820 = vld [vmem:[#allocation2 + $0x8] sm:$0xff]
  %v821 = vld [vmem:[#allocation2 + $0x10] sm:$0xff]
  %v822 = vld [vmem:[#allocation2 + $0x18] sm:$0xff]
  %v823 = vld [vmem:[#allocation2 + $0x20] sm:$0xff]
  %v824 = vld [vmem:[#allocation2 + $0x28] sm:$0xff]
  %v825 = vld [vmem:[#allocation2 + $0x30] sm:$0xff]
  %v826 = vld [vmem:[#allocation2 + $0x38] sm:$0xff]
  %v827 = vld [vmem:[#allocation2 + $0x40] sm:$0xff]
  %v828 = vld [vmem:[#allocation2 + $0x48] sm:$0xff]
  %v829 = vld [vmem:[#allocation2 + $0x50] sm:$0xff]
  %v830 = vld [vmem:[#allocation2 + $0x58] sm:$0xff]
  %v831 = vld [vmem:[#allocation2 + $0x60] sm:$0xff]
  %v832 = vld [vmem:[#allocation2 + $0x68] sm:$0xff]
  %v833 = vld [vmem:[#allocation2 + $0x70] sm:$0xff]
  %v834 = vld [vmem:[#allocation2 + $0x78] sm:$0xff]
  %v835 = vld [vmem:[#allocation2 + $0x80] sm:$0xff]
  %v836 = vld [vmem:[#allocation2 + $0x88] sm:$0xff]
  %v837 = vld [vmem:[#allocation2 + $0x90] sm:$0xff]
  %v838 = vld [vmem:[#allocation2 + $0x98] sm:$0xff]
  %v839 = vld [vmem:[#allocation2 + $0xa0] sm:$0xff]
  %v840 = vld [vmem:[#allocation2 + $0xa8] sm:$0xff]
  %v841 = vld [vmem:[#allocation2 + $0xb0] sm:$0xff]
  %v842 = vld [vmem:[#allocation2 + $0xb8] sm:$0xff]
  %v843 = vld [vmem:[#allocation2 + $0xc0] sm:$0xff]
  %v844 = vld [vmem:[#allocation2 + $0xc8] sm:$0xff]
  %v845 = vld [vmem:[#allocation2 + $0xd0] sm:$0xff]
  %v846 = vld [vmem:[#allocation2 + $0xd8] sm:$0xff]
  %v847 = vld [vmem:[#allocation2 + $0xe0] sm:$0xff]
  %v848 = vld [vmem:[#allocation2 + $0xe8] sm:$0xff]
  %v849 = vld [vmem:[#allocation2 + $0xf0] sm:$0xff]
  %v850 = vld [vmem:[#allocation2 + $0xf8] sm:$0xff]
  %v851 = vld [vmem:[#allocation2 + $0x100] sm:$0xff]
  %v852 = vld [vmem:[#allocation2 + $0x108] sm:$0xff]
  %v853 = vld [vmem:[#allocation2 + $0x110] sm:$0xff]
  %v854 = vld [vmem:[#allocation2 + $0x118] sm:$0xff]
  %vm855 = vcmask 588800
  %v857 = vsel %vm855, %v818, 0
  %859 = vmatprep.subr.mxu0 %v820
  %860 = vmatpush1.msra.mxu0 %v819
  %861 = vmatprep.subr.mxu0 %v824
  %862 = vmatpush1.msra.mxu0 %v823
  %863 = vmatprep.subr.mxu0 %v828
  %864 = vmatpush1.msra.mxu0 %v827
  %865 = vmatprep.subr.mxu0 %v832
  %866 = vmatpush1.msra.mxu0 %v831
  %867 = vmatprep.subr.mxu0 %v836
  %868 = vmatpush1.msra.mxu0 %v835
  %869 = vmatprep.subr.mxu0 %v840
  %870 = vmatpush1.msra.mxu0 %v839
  %871 = vmatprep.subr.mxu0 %v844
  %872 = vmatpush1.msra.mxu0 %v843
  %873 = vmatprep.subr.mxu0 %v848
  %874 = vmatpush1.msra.mxu0 %v847
  %875 = vmatprep.subr.mxu0 %v852
  %876 = vmatpush1.msra.mxu0 %v851
  %877 = vmatprep.subr.mxu0 0.0
  %878 = vmatpush1.msra.mxu0 0.0
  %879 = vmatprep.subr.mxu0 0.0
  %880 = vmatpush1.msra.mxu0 0.0
  %881 = vmatprep.subr.mxu0 0.0
  %882 = vmatpush1.msra.mxu0 0.0
  %883 = vmatprep.subr.mxu0 0.0
  %884 = vmatpush1.msra.mxu0 0.0
  %885 = vmatprep.subr.mxu0 0.0
  %886 = vmatpush1.msra.mxu0 0.0
  %887 = vmatprep.subr.mxu0 0.0
  %888 = vmatpush1.msra.mxu0 0.0
  %889 = vmatprep.subr.mxu0 0.0
  %890 = vmatpush1.msra.mxu0 0.0
  %891 = vmatprep.subr.mxu0 0.0
  %892 = vmatpush1.msra.mxu0 0.0
  %893 = vmatprep.subr.mxu0 0.0
  %894 = vmatpush1.msra.mxu0 0.0
  %895 = vmatprep.subr.mxu0 0.0
  %896 = vmatpush1.msra.mxu0 0.0
  %897 = vmatprep.subr.mxu0 0.0
  %898 = vmatpush1.msra.mxu0 0.0
  %899 = vmatprep.subr.mxu0 0.0
  %900 = vmatpush1.msra.mxu0 0.0
  %901 = vmatprep.subr.mxu0 0.0
  %902 = vmatpush1.msra.mxu0 0.0
  %903 = vmatprep.subr.mxu0 0.0
  %904 = vmatpush1.msra.mxu0 0.0
  %905 = vmatprep.subr.mxu0 0.0
  %906 = vmatpush1.msra.mxu0 0.0
  %907 = vmatprep.subr.mxu0 0.0
  %908 = vmatpush1.msra.mxu0 0.0
  %909 = vmatprep.subr.mxu0 0.0
  %910 = vmatpush1.msra.mxu0 0.0
  %911 = vmatprep.subr.mxu0 0.0
  %912 = vmatpush1.msra.mxu0 0.0
  %913 = vmatprep.subr.mxu0 0.0
  %914 = vmatpush1.msra.mxu0 0.0
  %915 = vmatprep.subr.mxu0 0.0
  %916 = vmatpush1.msra.mxu0 0.0
  %917 = vmatprep.subr.mxu0 0.0
  %918 = vmatpush1.msra.mxu0 0.0
  %919 = vmatprep.subr.mxu0 0.0
  %920 = vmatpush1.msra.mxu0 0.0
  %921 = vmatprep.subr.mxu0 0.0
  %922 = vmatpush1.msra.mxu0 0.0
  %923 = vmatprep.mubr.f32.mxu0 0.0
  %924 = vmatmul.mubr.f32.gmra.mrb[0].mxu0 %v857
  %v925 = vpop.f32.mrb[0].mxu0
  %v926 = vadd.f32 0.0, %v925
  %v927 = vpop.f32.mrb[0].mxu0
  %v928 = vadd.f32 0.0, %v927
  %929 = vdwg.mxu0
  %930 = vmatprep.subr.mxu0 %v822
  %931 = vmatpush1.msra.mxu0 %v821
  %932 = vmatprep.subr.mxu0 %v826
  %933 = vmatpush1.msra.mxu0 %v825
  %934 = vmatprep.subr.mxu0 %v830
  %935 = vmatpush1.msra.mxu0 %v829
  %936 = vmatprep.subr.mxu0 %v834
  %937 = vmatpush1.msra.mxu0 %v833
  %938 = vmatprep.subr.mxu0 %v838
  %939 = vmatpush1.msra.mxu0 %v837
  %940 = vmatprep.subr.mxu0 %v842
  %941 = vmatpush1.msra.mxu0 %v841
  %942 = vmatprep.subr.mxu0 %v846
  %943 = vmatpush1.msra.mxu0 %v845
  %944 = vmatprep.subr.mxu0 %v850
  %945 = vmatpush1.msra.mxu0 %v849
  %946 = vmatprep.subr.mxu0 %v854
  %947 = vmatpush1.msra.mxu0 %v853
  %948 = vmatprep.subr.mxu0 0.0
  %949 = vmatpush1.msra.mxu0 0.0
  %950 = vmatprep.subr.mxu0 0.0
  %951 = vmatpush1.msra.mxu0 0.0
  %952 = vmatprep.subr.mxu0 0.0
  %953 = vmatpush1.msra.mxu0 0.0
  %954 = vmatprep.subr.mxu0 0.0
  %955 = vmatpush1.msra.mxu0 0.0
  %956 = vmatprep.subr.mxu0 0.0
  %957 = vmatpush1.msra.mxu0 0.0
  %958 = vmatprep.subr.mxu0 0.0
  %959 = vmatpush1.msra.mxu0 0.0
  %960 = vmatprep.subr.mxu0 0.0
  %961 = vmatpush1.msra.mxu0 0.0
  %962 = vmatprep.subr.mxu0 0.0
  %963 = vmatpush1.msra.mxu0 0.0
  %964 = vmatprep.subr.mxu0 0.0
  %965 = vmatpush1.msra.mxu0 0.0
  %966 = vmatprep.subr.mxu0 0.0
  %967 = vmatpush1.msra.mxu0 0.0
  %968 = vmatprep.subr.mxu0 0.0
  %969 = vmatpush1.msra.mxu0 0.0
  %970 = vmatprep.subr.mxu0 0.0
  %971 = vmatpush1.msra.mxu0 0.0
  %972 = vmatprep.subr.mxu0 0.0
  %973 = vmatpush1.msra.mxu0 0.0
  %974 = vmatprep.subr.mxu0 0.0
  %975 = vmatpush1.msra.mxu0 0.0
  %976 = vmatprep.subr.mxu0 0.0
  %977 = vmatpush1.msra.mxu0 0.0
  %978 = vmatprep.subr.mxu0 0.0
  %979 = vmatpush1.msra.mxu0 0.0
  %980 = vmatprep.subr.mxu0 0.0
  %981 = vmatpush1.msra.mxu0 0.0
  %982 = vmatprep.subr.mxu0 0.0
  %983 = vmatpush1.msra.mxu0 0.0
  %984 = vmatprep.subr.mxu0 0.0
  %985 = vmatpush1.msra.mxu0 0.0
  %986 = vmatprep.subr.mxu0 0.0
  %987 = vmatpush1.msra.mxu0 0.0
  %988 = vmatprep.subr.mxu0 0.0
  %989 = vmatpush1.msra.mxu0 0.0
  %990 = vmatprep.subr.mxu0 0.0
  %991 = vmatpush1.msra.mxu0 0.0
  %992 = vmatprep.subr.mxu0 0.0
  %993 = vmatpush1.msra.mxu0 0.0
  %994 = vmatprep.mubr.f32.mxu0 0.0
  %995 = vmatmul.mubr.f32.gmra.mrb[0].mxu0 %v857
  %v996 = vpop.f32.mrb[0].mxu0
  %v997 = vadd.f32 0.0, %v996
  %v998 = vpop.f32.mrb[0].mxu0
  %v999 = vadd.f32 0.0, %v998
  %1000 = vdwg.mxu0
  %v1001 = vsel %vm137, %v926, 0.0
  %v1002 = vsel %vm137, %v928, 0.0
  %v1003 = vadd.f32 %v1001, %v1002
  %v1004 = vsel %vm137, %v997, 0.0
  %v1005 = vadd.f32 %v1003, %v1004
  %v1006 = vsel %vm137, %v999, 0.0
  %v1007 = vadd.f32 %v1005, %v1006
  %1008 = vadd.xlane.f32.xlu0 %v1007
  %v1009 = vpop.xlane.xlu0 %1008
  %v1010 = vrcp.pop 512.0
  %v1011 = vmul.f32 %v1009, %v1010
  %v1012 = vsub.f32 %v926, %v1011
  %v1013 = vsub.f32 %v928, %v1011
  %v1014 = vsub.f32 %v997, %v1011
  %v1015 = vsub.f32 %v999, %v1011
  %v1016 = vmul.f32 %v1012, %v1012
  %v1017 = vmul.f32 %v1013, %v1013
  %v1018 = vmul.f32 %v1014, %v1014
  %v1019 = vmul.f32 %v1015, %v1015
  %v1020 = vsel %vm137, %v1016, 0.0
  %v1021 = vsel %vm137, %v1017, 0.0
  %v1022 = vadd.f32 %v1020, %v1021
  %v1023 = vsel %vm137, %v1018, 0.0
  %v1024 = vadd.f32 %v1022, %v1023
  %v1025 = vsel %vm137, %v1019, 0.0
  %v1026 = vadd.f32 %v1024, %v1025
  %1027 = vadd.xlane.f32.xlu0 %v1026
  %v1028 = vpop.xlane.xlu0 %1027
  %v1029 = vmul.f32 %v1028, %v1010
  %v1030 = vadd.f32 %v1029, 1e-05
  %v1031 = vrsqrt.pop %v1030
  %v1032 = vmul.f32 %v1012, %v1031
  %v1033 = vmul.f32 %v1013, %v1031
  %v1034 = vmul.f32 %v1014, %v1031
  %v1035 = vmul.f32 %v1015, %v1031
  %v1036 = vld [vmem:[%s6] sm:$0xf]
  %1038 = vset.pattern.permute.xlu0 0
  %1039 = vperm.xlu0 %1038, %v1036
  %v1040 = vpop.permute.xlu0 %1039
  %v1042 = vmul.f32 %v1032, %v1040
  %v1043 = vmul.f32 %v1033, %v1040
  %v1044 = vmul.f32 %v1034, %v1040
  %v1045 = vmul.f32 %v1035, %v1040
  %v1046 = vld [vmem:[%s7] sm:$0xf]
  %1048 = vset.pattern.permute.xlu0 0
  %1049 = vperm.xlu0 %1048, %v1046
  %v1050 = vpop.permute.xlu0 %1049
  %v1052 = vadd.f32 %v1042, %v1050
  %v1053 = vadd.f32 %v1043, %v1050
  %v1054 = vadd.f32 %v1044, %v1050
  %v1055 = vadd.f32 %v1045, %v1050
  %v1056 = vmax.f32 %v1052, 0.0
  %v1057 = vmax.f32 %v1053, 0.0
  %v1058 = vmax.f32 %v1054, 0.0
  %v1059 = vmax.f32 %v1055, 0.0
  %1060 = vrot.lane.b32.xlu0 %v112, 111
  %v1061 = vpop.permute.xlu0 %1060
  %1062 = vrot.lane.b32.xlu0 %v116, 111
  %v1063 = vpop.permute.xlu0 %1062
  %1064 = vrot.lane.b32.xlu0 %v120, 111
  %v1065 = vpop.permute.xlu0 %1064
  %1066 = vrot.lane.b32.xlu0 %v124, 111
  %v1067 = vpop.permute.xlu0 %1066
  %v1068 = vsel %vm139, %v1061, %v1063
  %v1069 = vsel %vm139, %v1063, %v1065
  %v1070 = vsel %vm139, %v1065, %v1067
  %v1075 = vmul.f32 %v1056, %v1068
  %v1076 = vmul.f32 %v1057, %v1069
  %v1077 = vmul.f32 %v1058, %v1070
  %v1078 = vmul.f32 %v1059, %v1067
  %1083 = vrot.lane.b32.xlu0 %v1075, 17
  %v1084 = vpop.permute.xlu0 %1083
  %1085 = vrot.lane.b32.xlu0 %v1076, 17
  %v1086 = vpop.permute.xlu0 %1085
  %1087 = vrot.lane.b32.xlu0 %v1077, 17
  %v1088 = vpop.permute.xlu0 %1087
  %1089 = vrot.lane.b32.xlu0 %v1078, 17
  %v1090 = vpop.permute.xlu0 %1089
  %v1091 = vsel %vm158, %v1084, %v1086
  %v1092 = vsel %vm158, %v1086, %v1088
  %v1093 = vsel %vm158, %v1088, %v1090
  %1098 = vst.msk [vmem:[#allocation3] sm:$0xf] %vm166, %v1084
  %1099 = vst [vmem:[#allocation3 + $0x8] sm:$0xf] %v1091
  %1100 = vst [vmem:[#allocation3 + $0x10] sm:$0xf] %v1092
  %1101 = vst [vmem:[#allocation3 + $0x18] sm:$0xf] %v1093
  %1102 = vrot.lane.b32.xlu0 %v200, 112
  %v1103 = vpop.permute.xlu0 %1102
  %1104 = vrot.lane.b32.xlu0 %v204, 112
  %v1105 = vpop.permute.xlu0 %1104
  %1106 = vrot.lane.b32.xlu0 %v208, 112
  %v1107 = vpop.permute.xlu0 %1106
  %1108 = vrot.lane.b32.xlu0 %v212, 112
  %v1109 = vpop.permute.xlu0 %1108
  %v1110 = vsel %vm226, %v1103, %v1105
  %v1111 = vsel %vm226, %v1105, %v1107
  %v1112 = vsel %vm226, %v1107, %v1109
  %v1117 = vmul.f32 %v1056, %v1110
  %v1118 = vmul.f32 %v1057, %v1111
  %v1119 = vmul.f32 %v1058, %v1112
  %v1120 = vmul.f32 %v1059, %v1109
  %v1125 = vrot.slane %v1117, 4
  %v1126 = vrot.slane %v1118, 4
  %v1127 = vrot.slane %v1119, 4
  %v1128 = vrot.slane %v1120, 4
  %1129 = vrot.lane.b32.xlu0 %v1125, 16
  %v1130 = vpop.permute.xlu0 %1129
  %1131 = vrot.lane.b32.xlu0 %v1126, 16
  %v1132 = vpop.permute.xlu0 %1131
  %1133 = vrot.lane.b32.xlu0 %v1127, 16
  %v1134 = vpop.permute.xlu0 %1133
  %1135 = vrot.lane.b32.xlu0 %v1128, 16
  %v1136 = vpop.permute.xlu0 %1135
  %v1137 = vsel %vm245, %v1130, %v1132
  %v1138 = vsel %vm245, %v1132, %v1134
  %v1139 = vsel %vm245, %v1134, %v1136
  %1144 = vst.msk [vmem:[#allocation3] sm:$0xf0] %vm279, %v1130
  %1145 = vst [vmem:[#allocation3 + $0x8] sm:$0xf0] %v1137
  %1146 = vst [vmem:[#allocation3 + $0x10] sm:$0xf0] %v1138
  %1147 = vst [vmem:[#allocation3 + $0x18] sm:$0xf0] %v1139
  %1148 = vrot.lane.b32.xlu0 %v287, 113
  %v1149 = vpop.permute.xlu0 %1148
  %1150 = vrot.lane.b32.xlu0 %v291, 113
  %v1151 = vpop.permute.xlu0 %1150
  %1152 = vrot.lane.b32.xlu0 %v295, 113
  %v1153 = vpop.permute.xlu0 %1152
  %1154 = vrot.lane.b32.xlu0 %v299, 113
  %v1155 = vpop.permute.xlu0 %1154
  %v1156 = vsel %vm313, %v1149, %v1151
  %v1157 = vsel %vm313, %v1151, %v1153
  %v1158 = vsel %vm313, %v1153, %v1155
  %v1163 = vmul.f32 %v1056, %v1156
  %v1164 = vmul.f32 %v1057, %v1157
  %v1165 = vmul.f32 %v1058, %v1158
  %v1166 = vmul.f32 %v1059, %v1155
  %1171 = vrot.lane.b32.xlu0 %v1163, 15
  %v1172 = vpop.permute.xlu0 %1171
  %1173 = vrot.lane.b32.xlu0 %v1164, 15
  %v1174 = vpop.permute.xlu0 %1173
  %1175 = vrot.lane.b32.xlu0 %v1165, 15
  %v1176 = vpop.permute.xlu0 %1175
  %1177 = vrot.lane.b32.xlu0 %v1166, 15
  %v1178 = vpop.permute.xlu0 %1177
  %v1179 = vsel %vm332, %v1172, %v1174
  %v1180 = vsel %vm332, %v1174, %v1176
  %v1181 = vsel %vm332, %v1176, %v1178
  %1186 = vst.msk [vmem:[#allocation3 + $0x20] sm:$0xf] %vm340, %v1172
  %1187 = vst [vmem:[#allocation3 + $0x28] sm:$0xf] %v1179
  %1188 = vst [vmem:[#allocation3 + $0x30] sm:$0xf] %v1180
  %1189 = vst [vmem:[#allocation3 + $0x38] sm:$0xf] %v1181
  %1190 = vrot.lane.b32.xlu0 %v374, 127
  %v1191 = vpop.permute.xlu0 %1190
  %1192 = vrot.lane.b32.xlu0 %v378, 127
  %v1193 = vpop.permute.xlu0 %1192
  %1194 = vrot.lane.b32.xlu0 %v382, 127
  %v1195 = vpop.permute.xlu0 %1194
  %1196 = vrot.lane.b32.xlu0 %v386, 127
  %v1197 = vpop.permute.xlu0 %1196
  %v1198 = vsel %vm400, %v1191, %v1193
  %v1199 = vsel %vm400, %v1193, %v1195
  %v1200 = vsel %vm400, %v1195, %v1197
  %v1205 = vmul.f32 %v1056, %v1198
  %v1206 = vmul.f32 %v1057, %v1199
  %v1207 = vmul.f32 %v1058, %v1200
  %v1208 = vmul.f32 %v1059, %v1197
  %v1213 = vrot.slane %v1205, 4
  %v1214 = vrot.slane %v1206, 4
  %v1215 = vrot.slane %v1207, 4
  %v1216 = vrot.slane %v1208, 4
  %1217 = vrot.lane.b32.xlu0 %v1213, 1
  %v1218 = vpop.permute.xlu0 %1217
  %1219 = vrot.lane.b32.xlu0 %v1214, 1
  %v1220 = vpop.permute.xlu0 %1219
  %1221 = vrot.lane.b32.xlu0 %v1215, 1
  %v1222 = vpop.permute.xlu0 %1221
  %1223 = vrot.lane.b32.xlu0 %v1216, 1
  %v1224 = vpop.permute.xlu0 %1223
  %v1225 = vsel %vm419, %v1218, %v1220
  %v1226 = vsel %vm419, %v1220, %v1222
  %v1227 = vsel %vm419, %v1222, %v1224
  %1232 = vst.msk [vmem:[#allocation3 + $0x20] sm:$0xf0] %vm453, %v1218
  %1233 = vst [vmem:[#allocation3 + $0x28] sm:$0xf0] %v1225
  %1234 = vst [vmem:[#allocation3 + $0x30] sm:$0xf0] %v1226
  %1235 = vst [vmem:[#allocation3 + $0x38] sm:$0xf0] %v1227
  %1236 = vst [vmem:[#allocation3 + $0x40] sm:$0xf] %v1056
  %1237 = vst [vmem:[#allocation3 + $0x48] sm:$0xf] %v1057
  %1238 = vst [vmem:[#allocation3 + $0x50] sm:$0xf] %v1058
  %1239 = vst [vmem:[#allocation3 + $0x58] sm:$0xf] %v1059
  %1240 = vrot.lane.b32.xlu0 %v481, 1
  %v1241 = vpop.permute.xlu0 %1240
  %1242 = vrot.lane.b32.xlu0 %v485, 1
  %v1243 = vpop.permute.xlu0 %1242
  %1244 = vrot.lane.b32.xlu0 %v489, 1
  %v1245 = vpop.permute.xlu0 %1244
  %1246 = vrot.lane.b32.xlu0 %v493, 1
  %v1247 = vpop.permute.xlu0 %1246
  %v1248 = vsel %vm419, %v1241, %v1243
  %v1249 = vsel %vm419, %v1243, %v1245
  %v1250 = vsel %vm419, %v1245, %v1247
  %v1255 = vmul.f32 %v1056, %v1241
  %v1256 = vmul.f32 %v1057, %v1248
  %v1257 = vmul.f32 %v1058, %v1249
  %v1258 = vmul.f32 %v1059, %v1250
  %v1263 = vrot.slane %v1255, 4
  %v1264 = vrot.slane %v1256, 4
  %v1265 = vrot.slane %v1257, 4
  %v1266 = vrot.slane %v1258, 4
  %1267 = vrot.lane.b32.xlu0 %v1263, 127
  %v1268 = vpop.permute.xlu0 %1267
  %1269 = vrot.lane.b32.xlu0 %v1264, 127
  %v1270 = vpop.permute.xlu0 %1269
  %1271 = vrot.lane.b32.xlu0 %v1265, 127
  %v1272 = vpop.permute.xlu0 %1271
  %1273 = vrot.lane.b32.xlu0 %v1266, 127
  %v1274 = vpop.permute.xlu0 %1273
  %v1275 = vsel %vm400, %v1268, %v1270
  %v1276 = vsel %vm400, %v1270, %v1272
  %v1277 = vsel %vm400, %v1272, %v1274
  %1282 = vst [vmem:[#allocation3 + $0x40] sm:$0xf0] %v1275
  %1283 = vst [vmem:[#allocation3 + $0x48] sm:$0xf0] %v1276
  %1284 = vst [vmem:[#allocation3 + $0x50] sm:$0xf0] %v1277
  %1285 = vst.msk [vmem:[#allocation3 + $0x58] sm:$0xf0] %vm561, %v1274
  %1286 = vrot.lane.b32.xlu0 %v566, 15
  %v1287 = vpop.permute.xlu0 %1286
  %1288 = vrot.lane.b32.xlu0 %v570, 15
  %v1289 = vpop.permute.xlu0 %1288
  %1290 = vrot.lane.b32.xlu0 %v574, 15
  %v1291 = vpop.permute.xlu0 %1290
  %1292 = vrot.lane.b32.xlu0 %v578, 15
  %v1293 = vpop.permute.xlu0 %1292
  %v1294 = vsel %vm332, %v1287, %v1289
  %v1295 = vsel %vm332, %v1289, %v1291
  %v1296 = vsel %vm332, %v1291, %v1293
  %v1301 = vmul.f32 %v1056, %v1287
  %v1302 = vmul.f32 %v1057, %v1294
  %v1303 = vmul.f32 %v1058, %v1295
  %v1304 = vmul.f32 %v1059, %v1296
  %1309 = vrot.lane.b32.xlu0 %v1301, 113
  %v1310 = vpop.permute.xlu0 %1309
  %1311 = vrot.lane.b32.xlu0 %v1302, 113
  %v1312 = vpop.permute.xlu0 %1311
  %1313 = vrot.lane.b32.xlu0 %v1303, 113
  %v1314 = vpop.permute.xlu0 %1313
  %1315 = vrot.lane.b32.xlu0 %v1304, 113
  %v1316 = vpop.permute.xlu0 %1315
  %v1317 = vsel %vm313, %v1310, %v1312
  %v1318 = vsel %vm313, %v1312, %v1314
  %v1319 = vsel %vm313, %v1314, %v1316
  %1324 = vst [vmem:[#allocation3 + $0x60] sm:$0xf] %v1317
  %1325 = vst [vmem:[#allocation3 + $0x68] sm:$0xf] %v1318
  %1326 = vst [vmem:[#allocation3 + $0x70] sm:$0xf] %v1319
  %1327 = vst.msk [vmem:[#allocation3 + $0x78] sm:$0xf] %vm620, %v1316
  %1328 = vrot.lane.b32.xlu0 %v651, 16
  %v1329 = vpop.permute.xlu0 %1328
  %1330 = vrot.lane.b32.xlu0 %v655, 16
  %v1331 = vpop.permute.xlu0 %1330
  %1332 = vrot.lane.b32.xlu0 %v659, 16
  %v1333 = vpop.permute.xlu0 %1332
  %1334 = vrot.lane.b32.xlu0 %v663, 16
  %v1335 = vpop.permute.xlu0 %1334
  %v1336 = vsel %vm245, %v1329, %v1331
  %v1337 = vsel %vm245, %v1331, %v1333
  %v1338 = vsel %vm245, %v1333, %v1335
  %v1343 = vmul.f32 %v1056, %v1329
  %v1344 = vmul.f32 %v1057, %v1336
  %v1345 = vmul.f32 %v1058, %v1337
  %v1346 = vmul.f32 %v1059, %v1338
  %v1351 = vrot.slane %v1343, 4
  %v1352 = vrot.slane %v1344, 4
  %v1353 = vrot.slane %v1345, 4
  %v1354 = vrot.slane %v1346, 4
  %1355 = vrot.lane.b32.xlu0 %v1351, 112
  %v1356 = vpop.permute.xlu0 %1355
  %1357 = vrot.lane.b32.xlu0 %v1352, 112
  %v1358 = vpop.permute.xlu0 %1357
  %1359 = vrot.lane.b32.xlu0 %v1353, 112
  %v1360 = vpop.permute.xlu0 %1359
  %1361 = vrot.lane.b32.xlu0 %v1354, 112
  %v1362 = vpop.permute.xlu0 %1361
  %v1363 = vsel %vm226, %v1356, %v1358
  %v1364 = vsel %vm226, %v1358, %v1360
  %v1365 = vsel %vm226, %v1360, %v1362
  %1370 = vst [vmem:[#allocation3 + $0x60] sm:$0xf0] %v1363
  %1371 = vst [vmem:[#allocation3 + $0x68] sm:$0xf0] %v1364
  %1372 = vst [vmem:[#allocation3 + $0x70] sm:$0xf0] %v1365
  %1373 = vst.msk [vmem:[#allocation3 + $0x78] sm:$0xf0] %vm731, %v1362
  %1374 = vrot.lane.b32.xlu0 %v736, 17
  %v1375 = vpop.permute.xlu0 %1374
  %1376 = vrot.lane.b32.xlu0 %v740, 17
  %v1377 = vpop.permute.xlu0 %1376
  %1378 = vrot.lane.b32.xlu0 %v744, 17
  %v1379 = vpop.permute.xlu0 %1378
  %1380 = vrot.lane.b32.xlu0 %v748, 17
  %v1381 = vpop.permute.xlu0 %1380
  %v1382 = vsel %vm158, %v1375, %v1377
  %v1383 = vsel %vm158, %v1377, %v1379
  %v1384 = vsel %vm158, %v1379, %v1381
  %v1389 = vmul.f32 %v1056, %v1375
  %v1390 = vmul.f32 %v1057, %v1382
  %v1391 = vmul.f32 %v1058, %v1383
  %v1392 = vmul.f32 %v1059, %v1384
  %1397 = vrot.lane.b32.xlu0 %v1389, 111
  %v1398 = vpop.permute.xlu0 %1397
  %1399 = vrot.lane.b32.xlu0 %v1390, 111
  %v1400 = vpop.permute.xlu0 %1399
  %1401 = vrot.lane.b32.xlu0 %v1391, 111
  %v1402 = vpop.permute.xlu0 %1401
  %1403 = vrot.lane.b32.xlu0 %v1392, 111
  %v1404 = vpop.permute.xlu0 %1403
  %v1405 = vsel %vm139, %v1398, %v1400
  %v1406 = vsel %vm139, %v1400, %v1402
  %v1407 = vsel %vm139, %v1402, %v1404
  %1412 = vst [vmem:[#allocation3 + $0x80] sm:$0xf] %v1405
  %1413 = vst [vmem:[#allocation3 + $0x88] sm:$0xf] %v1406
  %1414 = vst [vmem:[#allocation3 + $0x90] sm:$0xf] %v1407
  %1415 = vst.msk [vmem:[#allocation3 + $0x98] sm:$0xf] %vm790, %v1404
  %v1416 = vld [vmem:[%s4] sm:$0xf]
  %v1417 = vld [vmem:[#allocation3] sm:$0xff]
  %v1418 = vld [vmem:[#allocation3 + $0x8] sm:$0xff]
  %v1419 = vld [vmem:[#allocation3 + $0x10] sm:$0xff]
  %v1420 = vld [vmem:[#allocation3 + $0x18] sm:$0xff]
  %v1421 = vld [vmem:[#allocation3 + $0x20] sm:$0xff]
  %v1422 = vld [vmem:[#allocation3 + $0x28] sm:$0xff]
  %v1423 = vld [vmem:[#allocation3 + $0x30] sm:$0xff]
  %v1424 = vld [vmem:[#allocation3 + $0x38] sm:$0xff]
  %v1425 = vld [vmem:[#allocation3 + $0x40] sm:$0xff]
  %v1426 = vld [vmem:[#allocation3 + $0x48] sm:$0xff]
  %v1427 = vld [vmem:[#allocation3 + $0x50] sm:$0xff]
  %v1428 = vld [vmem:[#allocation3 + $0x58] sm:$0xff]
  %v1429 = vld [vmem:[#allocation3 + $0x60] sm:$0xff]
  %v1430 = vld [vmem:[#allocation3 + $0x68] sm:$0xff]
  %v1431 = vld [vmem:[#allocation3 + $0x70] sm:$0xff]
  %v1432 = vld [vmem:[#allocation3 + $0x78] sm:$0xff]
  %v1433 = vld [vmem:[#allocation3 + $0x80] sm:$0xf]
  %v1434 = vld [vmem:[#allocation3 + $0x88] sm:$0xf]
  %v1435 = vld [vmem:[#allocation3 + $0x90] sm:$0xf]
  %v1436 = vld [vmem:[#allocation3 + $0x98] sm:$0xf]
  %vm1437 = vcmask 293888
  %v1439 = vsel %vm1437, %v1416, 0
  %v1442 = vsel %vm137, %v1433, 0
  %v1445 = vsel %vm137, %v1434, 0
  %v1448 = vsel %vm137, %v1435, 0
  %v1451 = vsel %vm137, %v1436, 0
  %1453 = vmatprep.subr.mxu0 %v1418
  %1454 = vmatpush1.msra.mxu0 %v1417
  %1455 = vmatprep.subr.mxu0 %v1422
  %1456 = vmatpush1.msra.mxu0 %v1421
  %1457 = vmatprep.subr.mxu0 %v1426
  %1458 = vmatpush1.msra.mxu0 %v1425
  %1459 = vmatprep.subr.mxu0 %v1430
  %1460 = vmatpush1.msra.mxu0 %v1429
  %1461 = vmatprep.subr.mxu0 %v1445
  %1462 = vmatpush1.msra.mxu0 %v1442
  %1463 = vmatprep.subr.mxu0 0.0
  %1464 = vmatpush1.msra.mxu0 0.0
  %1465 = vmatprep.subr.mxu0 0.0
  %1466 = vmatpush1.msra.mxu0 0.0
  %1467 = vmatprep.subr.mxu0 0.0
  %1468 = vmatpush1.msra.mxu0 0.0
  %1469 = vmatprep.subr.mxu0 0.0
  %1470 = vmatpush1.msra.mxu0 0.0
  %1471 = vmatprep.subr.mxu0 0.0
  %1472 = vmatpush1.msra.mxu0 0.0
  %1473 = vmatprep.subr.mxu0 0.0
  %1474 = vmatpush1.msra.mxu0 0.0
  %1475 = vmatprep.subr.mxu0 0.0
  %1476 = vmatpush1.msra.mxu0 0.0
  %1477 = vmatprep.subr.mxu0 0.0
  %1478 = vmatpush1.msra.mxu0 0.0
  %1479 = vmatprep.subr.mxu0 0.0
  %1480 = vmatpush1.msra.mxu0 0.0
  %1481 = vmatprep.subr.mxu0 0.0
  %1482 = vmatpush1.msra.mxu0 0.0
  %1483 = vmatprep.subr.mxu0 0.0
  %1484 = vmatpush1.msra.mxu0 0.0
  %1485 = vmatprep.subr.mxu0 0.0
  %1486 = vmatpush1.msra.mxu0 0.0
  %1487 = vmatprep.subr.mxu0 0.0
  %1488 = vmatpush1.msra.mxu0 0.0
  %1489 = vmatprep.subr.mxu0 0.0
  %1490 = vmatpush1.msra.mxu0 0.0
  %1491 = vmatprep.subr.mxu0 0.0
  %1492 = vmatpush1.msra.mxu0 0.0
  %1493 = vmatprep.subr.mxu0 0.0
  %1494 = vmatpush1.msra.mxu0 0.0
  %1495 = vmatprep.subr.mxu0 0.0
  %1496 = vmatpush1.msra.mxu0 0.0
  %1497 = vmatprep.subr.mxu0 0.0
  %1498 = vmatpush1.msra.mxu0 0.0
  %1499 = vmatprep.subr.mxu0 0.0
  %1500 = vmatpush1.msra.mxu0 0.0
  %1501 = vmatprep.subr.mxu0 0.0
  %1502 = vmatpush1.msra.mxu0 0.0
  %1503 = vmatprep.subr.mxu0 0.0
  %1504 = vmatpush1.msra.mxu0 0.0
  %1505 = vmatprep.subr.mxu0 0.0
  %1506 = vmatpush1.msra.mxu0 0.0
  %1507 = vmatprep.subr.mxu0 0.0
  %1508 = vmatpush1.msra.mxu0 0.0
  %1509 = vmatprep.subr.mxu0 0.0
  %1510 = vmatpush1.msra.mxu0 0.0
  %1511 = vmatprep.subr.mxu0 0.0
  %1512 = vmatpush1.msra.mxu0 0.0
  %1513 = vmatprep.subr.mxu0 0.0
  %1514 = vmatpush1.msra.mxu0 0.0
  %1515 = vmatprep.subr.mxu0 0.0
  %1516 = vmatpush1.msra.mxu0 0.0
  %1517 = vmatprep.mubr.f32.mxu0 0.0
  %1518 = vmatmul.mubr.f32.gmra.mrb[0].mxu0 %v1439
  %v1519 = vpop.f32.mrb[0].mxu0
  %v1520 = vadd.f32 0.0, %v1519
  %v1521 = vpop.f32.mrb[0].mxu0
  %v1522 = vadd.f32 0.0, %v1521
  %1523 = vdwg.mxu0
  %1524 = vmatprep.subr.mxu0 %v1420
  %1525 = vmatpush1.msra.mxu0 %v1419
  %1526 = vmatprep.subr.mxu0 %v1424
  %1527 = vmatpush1.msra.mxu0 %v1423
  %1528 = vmatprep.subr.mxu0 %v1428
  %1529 = vmatpush1.msra.mxu0 %v1427
  %1530 = vmatprep.subr.mxu0 %v1432
  %1531 = vmatpush1.msra.mxu0 %v1431
  %1532 = vmatprep.subr.mxu0 %v1451
  %1533 = vmatpush1.msra.mxu0 %v1448
  %1534 = vmatprep.subr.mxu0 0.0
  %1535 = vmatpush1.msra.mxu0 0.0
  %1536 = vmatprep.subr.mxu0 0.0
  %1537 = vmatpush1.msra.mxu0 0.0
  %1538 = vmatprep.subr.mxu0 0.0
  %1539 = vmatpush1.msra.mxu0 0.0
  %1540 = vmatprep.subr.mxu0 0.0
  %1541 = vmatpush1.msra.mxu0 0.0
  %1542 = vmatprep.subr.mxu0 0.0
  %1543 = vmatpush1.msra.mxu0 0.0
  %1544 = vmatprep.subr.mxu0 0.0
  %1545 = vmatpush1.msra.mxu0 0.0
  %1546 = vmatprep.subr.mxu0 0.0
  %1547 = vmatpush1.msra.mxu0 0.0
  %1548 = vmatprep.subr.mxu0 0.0
  %1549 = vmatpush1.msra.mxu0 0.0
  %1550 = vmatprep.subr.mxu0 0.0
  %1551 = vmatpush1.msra.mxu0 0.0
  %1552 = vmatprep.subr.mxu0 0.0
  %1553 = vmatpush1.msra.mxu0 0.0
  %1554 = vmatprep.subr.mxu0 0.0
  %1555 = vmatpush1.msra.mxu0 0.0
  %1556 = vmatprep.subr.mxu0 0.0
  %1557 = vmatpush1.msra.mxu0 0.0
  %1558 = vmatprep.subr.mxu0 0.0
  %1559 = vmatpush1.msra.mxu0 0.0
  %1560 = vmatprep.subr.mxu0 0.0
  %1561 = vmatpush1.msra.mxu0 0.0
  %1562 = vmatprep.subr.mxu0 0.0
  %1563 = vmatpush1.msra.mxu0 0.0
  %1564 = vmatprep.subr.mxu0 0.0
  %1565 = vmatpush1.msra.mxu0 0.0
  %1566 = vmatprep.subr.mxu0 0.0
  %1567 = vmatpush1.msra.mxu0 0.0
  %1568 = vmatprep.subr.mxu0 0.0
  %1569 = vmatpush1.msra.mxu0 0.0
  %1570 = vmatprep.subr.mxu0 0.0
  %1571 = vmatpush1.msra.mxu0 0.0
  %1572 = vmatprep.subr.mxu0 0.0
  %1573 = vmatpush1.msra.mxu0 0.0
  %1574 = vmatprep.subr.mxu0 0.0
  %1575 = vmatpush1.msra.mxu0 0.0
  %1576 = vmatprep.subr.mxu0 0.0
  %1577 = vmatpush1.msra.mxu0 0.0
  %1578 = vmatprep.subr.mxu0 0.0
  %1579 = vmatpush1.msra.mxu0 0.0
  %1580 = vmatprep.subr.mxu0 0.0
  %1581 = vmatpush1.msra.mxu0 0.0
  %1582 = vmatprep.subr.mxu0 0.0
  %1583 = vmatpush1.msra.mxu0 0.0
  %1584 = vmatprep.subr.mxu0 0.0
  %1585 = vmatpush1.msra.mxu0 0.0
  %1586 = vmatprep.subr.mxu0 0.0
  %1587 = vmatpush1.msra.mxu0 0.0
  %1588 = vmatprep.mubr.f32.mxu0 0.0
  %1589 = vmatmul.mubr.f32.gmra.mrb[0].mxu0 %v1439
  %v1590 = vpop.f32.mrb[0].mxu0
  %v1591 = vadd.f32 0.0, %v1590
  %v1592 = vpop.f32.mrb[0].mxu0
  %v1593 = vadd.f32 0.0, %v1592
  %1594 = vdwg.mxu0
  %v1595 = vsel %vm137, %v1520, 0.0
  %v1596 = vsel %vm137, %v1522, 0.0
  %v1597 = vadd.f32 %v1595, %v1596
  %v1598 = vsel %vm137, %v1591, 0.0
  %v1599 = vadd.f32 %v1597, %v1598
  %v1600 = vsel %vm137, %v1593, 0.0
  %v1601 = vadd.f32 %v1599, %v1600
  %1602 = vadd.xlane.f32.xlu0 %v1601
  %v1603 = vpop.xlane.xlu0 %1602
  %v1604 = vmul.f32 %v1603, %v1010
  %v1605 = vsub.f32 %v1520, %v1604
  %v1606 = vsub.f32 %v1522, %v1604
  %v1607 = vsub.f32 %v1591, %v1604
  %v1608 = vsub.f32 %v1593, %v1604
  %v1609 = vmul.f32 %v1605, %v1605
  %v1610 = vmul.f32 %v1606, %v1606
  %v1611 = vmul.f32 %v1607, %v1607
  %v1612 = vmul.f32 %v1608, %v1608
  %v1613 = vsel %vm137, %v1609, 0.0
  %v1614 = vsel %vm137, %v1610, 0.0
  %v1615 = vadd.f32 %v1613, %v1614
  %v1616 = vsel %vm137, %v1611, 0.0
  %v1617 = vadd.f32 %v1615, %v1616
  %v1618 = vsel %vm137, %v1612, 0.0
  %v1619 = vadd.f32 %v1617, %v1618
  %1620 = vadd.xlane.f32.xlu0 %v1619
  %v1621 = vpop.xlane.xlu0 %1620
  %v1622 = vmul.f32 %v1621, %v1010
  %v1623 = vadd.f32 %v1622, 1e-05
  %v1624 = vrsqrt.pop %v1623
  %v1625 = vmul.f32 %v1605, %v1624
  %v1626 = vmul.f32 %v1606, %v1624
  %v1627 = vmul.f32 %v1607, %v1624
  %v1628 = vmul.f32 %v1608, %v1624
  %v1629 = vld [vmem:[%s8] sm:$0xf]
  %1631 = vset.pattern.permute.xlu0 0
  %1632 = vperm.xlu0 %1631, %v1629
  %v1633 = vpop.permute.xlu0 %1632
  %v1635 = vmul.f32 %v1625, %v1633
  %v1636 = vmul.f32 %v1626, %v1633
  %v1637 = vmul.f32 %v1627, %v1633
  %v1638 = vmul.f32 %v1628, %v1633
  %v1639 = vld [vmem:[%s9] sm:$0xf]
  %1641 = vset.pattern.permute.xlu0 0
  %1642 = vperm.xlu0 %1641, %v1639
  %v1643 = vpop.permute.xlu0 %1642
  %v1645 = vadd.f32 %v1635, %v1643
  %v1646 = vadd.f32 %v1636, %v1643
  %v1647 = vadd.f32 %v1637, %v1643
  %v1648 = vadd.f32 %v1638, %v1643
  %v1649 = vmax.f32 %v1645, 0.0
  %v1650 = vmax.f32 %v1646, 0.0
  %v1651 = vmax.f32 %v1647, 0.0
  %v1652 = vmax.f32 %v1648, 0.0
  %v1653 = vmul.f32 %v1649, %v1068
  %v1654 = vmul.f32 %v1650, %v1069
  %v1655 = vmul.f32 %v1651, %v1070
  %v1656 = vmul.f32 %v1652, %v1067
  %1661 = vrot.lane.b32.xlu0 %v1653, 17
  %v1662 = vpop.permute.xlu0 %1661
  %1663 = vrot.lane.b32.xlu0 %v1654, 17
  %v1664 = vpop.permute.xlu0 %1663
  %1665 = vrot.lane.b32.xlu0 %v1655, 17
  %v1666 = vpop.permute.xlu0 %1665
  %1667 = vrot.lane.b32.xlu0 %v1656, 17
  %v1668 = vpop.permute.xlu0 %1667
  %v1669 = vsel %vm158, %v1662, %v1664
  %v1670 = vsel %vm158, %v1664, %v1666
  %v1671 = vsel %vm158, %v1666, %v1668
  %1676 = vst.msk [vmem:[#allocation3] sm:$0xf] %vm166, %v1662
  %1677 = vst [vmem:[#allocation3 + $0x8] sm:$0xf] %v1669
  %1678 = vst [vmem:[#allocation3 + $0x10] sm:$0xf] %v1670
  %1679 = vst [vmem:[#allocation3 + $0x18] sm:$0xf] %v1671
  %v1680 = vmul.f32 %v1649, %v1110
  %v1681 = vmul.f32 %v1650, %v1111
  %v1682 = vmul.f32 %v1651, %v1112
  %v1683 = vmul.f32 %v1652, %v1109
  %v1688 = vrot.slane %v1680, 4
  %v1689 = vrot.slane %v1681, 4
  %v1690 = vrot.slane %v1682, 4
  %v1691 = vrot.slane %v1683, 4
  %1692 = vrot.lane.b32.xlu0 %v1688, 16
  %v1693 = vpop.permute.xlu0 %1692
  %1694 = vrot.lane.b32.xlu0 %v1689, 16
  %v1695 = vpop.permute.xlu0 %1694
  %1696 = vrot.lane.b32.xlu0 %v1690, 16
  %v1697 = vpop.permute.xlu0 %1696
  %1698 = vrot.lane.b32.xlu0 %v1691, 16
  %v1699 = vpop.permute.xlu0 %1698
  %v1700 = vsel %vm245, %v1693, %v1695
  %v1701 = vsel %vm245, %v1695, %v1697
  %v1702 = vsel %vm245, %v1697, %v1699
  %1707 = vst.msk [vmem:[#allocation3] sm:$0xf0] %vm279, %v1693
  %1708 = vst [vmem:[#allocation3 + $0x8] sm:$0xf0] %v1700
  %1709 = vst [vmem:[#allocation3 + $0x10] sm:$0xf0] %v1701
  %1710 = vst [vmem:[#allocation3 + $0x18] sm:$0xf0] %v1702
  %v1711 = vmul.f32 %v1649, %v1156
  %v1712 = vmul.f32 %v1650, %v1157
  %v1713 = vmul.f32 %v1651, %v1158
  %v1714 = vmul.f32 %v1652, %v1155
  %1719 = vrot.lane.b32.xlu0 %v1711, 15
  %v1720 = vpop.permute.xlu0 %1719
  %1721 = vrot.lane.b32.xlu0 %v1712, 15
  %v1722 = vpop.permute.xlu0 %1721
  %1723 = vrot.lane.b32.xlu0 %v1713, 15
  %v1724 = vpop.permute.xlu0 %1723
  %1725 = vrot.lane.b32.xlu0 %v1714, 15
  %v1726 = vpop.permute.xlu0 %1725
  %v1727 = vsel %vm332, %v1720, %v1722
  %v1728 = vsel %vm332, %v1722, %v1724
  %v1729 = vsel %vm332, %v1724, %v1726
  %1734 = vst.msk [vmem:[#allocation3 + $0x20] sm:$0xf] %vm340, %v1720
  %1735 = vst [vmem:[#allocation3 + $0x28] sm:$0xf] %v1727
  %1736 = vst [vmem:[#allocation3 + $0x30] sm:$0xf] %v1728
  %1737 = vst [vmem:[#allocation3 + $0x38] sm:$0xf] %v1729
  %v1738 = vmul.f32 %v1649, %v1198
  %v1739 = vmul.f32 %v1650, %v1199
  %v1740 = vmul.f32 %v1651, %v1200
  %v1741 = vmul.f32 %v1652, %v1197
  %v1746 = vrot.slane %v1738, 4
  %v1747 = vrot.slane %v1739, 4
  %v1748 = vrot.slane %v1740, 4
  %v1749 = vrot.slane %v1741, 4
  %1750 = vrot.lane.b32.xlu0 %v1746, 1
  %v1751 = vpop.permute.xlu0 %1750
  %1752 = vrot.lane.b32.xlu0 %v1747, 1
  %v1753 = vpop.permute.xlu0 %1752
  %1754 = vrot.lane.b32.xlu0 %v1748, 1
  %v1755 = vpop.permute.xlu0 %1754
  %1756 = vrot.lane.b32.xlu0 %v1749, 1
  %v1757 = vpop.permute.xlu0 %1756
  %v1758 = vsel %vm419, %v1751, %v1753
  %v1759 = vsel %vm419, %v1753, %v1755
  %v1760 = vsel %vm419, %v1755, %v1757
  %1765 = vst.msk [vmem:[#allocation3 + $0x20] sm:$0xf0] %vm453, %v1751
  %1766 = vst [vmem:[#allocation3 + $0x28] sm:$0xf0] %v1758
  %1767 = vst [vmem:[#allocation3 + $0x30] sm:$0xf0] %v1759
  %1768 = vst [vmem:[#allocation3 + $0x38] sm:$0xf0] %v1760
  %1769 = vst [vmem:[#allocation3 + $0x40] sm:$0xf] %v1649
  %1770 = vst [vmem:[#allocation3 + $0x48] sm:$0xf] %v1650
  %1771 = vst [vmem:[#allocation3 + $0x50] sm:$0xf] %v1651
  %1772 = vst [vmem:[#allocation3 + $0x58] sm:$0xf] %v1652
  %v1773 = vmul.f32 %v1649, %v1241
  %v1774 = vmul.f32 %v1650, %v1248
  %v1775 = vmul.f32 %v1651, %v1249
  %v1776 = vmul.f32 %v1652, %v1250
  %v1781 = vrot.slane %v1773, 4
  %v1782 = vrot.slane %v1774, 4
  %v1783 = vrot.slane %v1775, 4
  %v1784 = vrot.slane %v1776, 4
  %1785 = vrot.lane.b32.xlu0 %v1781, 127
  %v1786 = vpop.permute.xlu0 %1785
  %1787 = vrot.lane.b32.xlu0 %v1782, 127
  %v1788 = vpop.permute.xlu0 %1787
  %1789 = vrot.lane.b32.xlu0 %v1783, 127
  %v1790 = vpop.permute.xlu0 %1789
  %1791 = vrot.lane.b32.xlu0 %v1784, 127
  %v1792 = vpop.permute.xlu0 %1791
  %v1793 = vsel %vm400, %v1786, %v1788
  %v1794 = vsel %vm400, %v1788, %v1790
  %v1795 = vsel %vm400, %v1790, %v1792
  %1800 = vst [vmem:[#allocation3 + $0x40] sm:$0xf0] %v1793
  %1801 = vst [vmem:[#allocation3 + $0x48] sm:$0xf0] %v1794
  %1802 = vst [vmem:[#allocation3 + $0x50] sm:$0xf0] %v1795
  %1803 = vst.msk [vmem:[#allocation3 + $0x58] sm:$0xf0] %vm561, %v1792
  %v1804 = vmul.f32 %v1649, %v1287
  %v1805 = vmul.f32 %v1650, %v1294
  %v1806 = vmul.f32 %v1651, %v1295
  %v1807 = vmul.f32 %v1652, %v1296
  %1812 = vrot.lane.b32.xlu0 %v1804, 113
  %v1813 = vpop.permute.xlu0 %1812
  %1814 = vrot.lane.b32.xlu0 %v1805, 113
  %v1815 = vpop.permute.xlu0 %1814
  %1816 = vrot.lane.b32.xlu0 %v1806, 113
  %v1817 = vpop.permute.xlu0 %1816
  %1818 = vrot.lane.b32.xlu0 %v1807, 113
  %v1819 = vpop.permute.xlu0 %1818
  %v1820 = vsel %vm313, %v1813, %v1815
  %v1821 = vsel %vm313, %v1815, %v1817
  %v1822 = vsel %vm313, %v1817, %v1819
  %1827 = vst [vmem:[#allocation3 + $0x60] sm:$0xf] %v1820
  %1828 = vst [vmem:[#allocation3 + $0x68] sm:$0xf] %v1821
  %1829 = vst [vmem:[#allocation3 + $0x70] sm:$0xf] %v1822
  %1830 = vst.msk [vmem:[#allocation3 + $0x78] sm:$0xf] %vm620, %v1819
  %v1831 = vmul.f32 %v1649, %v1329
  %v1832 = vmul.f32 %v1650, %v1336
  %v1833 = vmul.f32 %v1651, %v1337
  %v1834 = vmul.f32 %v1652, %v1338
  %v1839 = vrot.slane %v1831, 4
  %v1840 = vrot.slane %v1832, 4
  %v1841 = vrot.slane %v1833, 4
  %v1842 = vrot.slane %v1834, 4
  %1843 = vrot.lane.b32.xlu0 %v1839, 112
  %v1844 = vpop.permute.xlu0 %1843
  %1845 = vrot.lane.b32.xlu0 %v1840, 112
  %v1846 = vpop.permute.xlu0 %1845
  %1847 = vrot.lane.b32.xlu0 %v1841, 112
  %v1848 = vpop.permute.xlu0 %1847
  %1849 = vrot.lane.b32.xlu0 %v1842, 112
  %v1850 = vpop.permute.xlu0 %1849
  %v1851 = vsel %vm226, %v1844, %v1846
  %v1852 = vsel %vm226, %v1846, %v1848
  %v1853 = vsel %vm226, %v1848, %v1850
  %1858 = vst [vmem:[#allocation3 + $0x60] sm:$0xf0] %v1851
  %1859 = vst [vmem:[#allocation3 + $0x68] sm:$0xf0] %v1852
  %1860 = vst [vmem:[#allocation3 + $0x70] sm:$0xf0] %v1853
  %1861 = vst.msk [vmem:[#allocation3 + $0x78] sm:$0xf0] %vm731, %v1850
  %v1862 = vmul.f32 %v1649, %v1375
  %v1863 = vmul.f32 %v1650, %v1382
  %v1864 = vmul.f32 %v1651, %v1383
  %v1865 = vmul.f32 %v1652, %v1384
  %1870 = vrot.lane.b32.xlu0 %v1862, 111
  %v1871 = vpop.permute.xlu0 %1870
  %1872 = vrot.lane.b32.xlu0 %v1863, 111
  %v1873 = vpop.permute.xlu0 %1872
  %1874 = vrot.lane.b32.xlu0 %v1864, 111
  %v1875 = vpop.permute.xlu0 %1874
  %1876 = vrot.lane.b32.xlu0 %v1865, 111
  %v1877 = vpop.permute.xlu0 %1876
  %v1878 = vsel %vm139, %v1871, %v1873
  %v1879 = vsel %vm139, %v1873, %v1875
  %v1880 = vsel %vm139, %v1875, %v1877
  %1885 = vst [vmem:[#allocation3 + $0x80] sm:$0xf] %v1878
  %1886 = vst [vmem:[#allocation3 + $0x88] sm:$0xf] %v1879
  %1887 = vst [vmem:[#allocation3 + $0x90] sm:$0xf] %v1880
  %1888 = vst.msk [vmem:[#allocation3 + $0x98] sm:$0xf] %vm790, %v1877
  %v1889 = vld [vmem:[%s5] sm:$0xf]
  %v1890 = vld [vmem:[#allocation3] sm:$0xff]
  %v1891 = vld [vmem:[#allocation3 + $0x8] sm:$0xff]
  %v1892 = vld [vmem:[#allocation3 + $0x10] sm:$0xff]
  %v1893 = vld [vmem:[#allocation3 + $0x18] sm:$0xff]
  %v1894 = vld [vmem:[#allocation3 + $0x20] sm:$0xff]
  %v1895 = vld [vmem:[#allocation3 + $0x28] sm:$0xff]
  %v1896 = vld [vmem:[#allocation3 + $0x30] sm:$0xff]
  %v1897 = vld [vmem:[#allocation3 + $0x38] sm:$0xff]
  %v1898 = vld [vmem:[#allocation3 + $0x40] sm:$0xff]
  %v1899 = vld [vmem:[#allocation3 + $0x48] sm:$0xff]
  %v1900 = vld [vmem:[#allocation3 + $0x50] sm:$0xff]
  %v1901 = vld [vmem:[#allocation3 + $0x58] sm:$0xff]
  %v1902 = vld [vmem:[#allocation3 + $0x60] sm:$0xff]
  %v1903 = vld [vmem:[#allocation3 + $0x68] sm:$0xff]
  %v1904 = vld [vmem:[#allocation3 + $0x70] sm:$0xff]
  %v1905 = vld [vmem:[#allocation3 + $0x78] sm:$0xff]
  %v1906 = vld [vmem:[#allocation3 + $0x80] sm:$0xf]
  %v1907 = vld [vmem:[#allocation3 + $0x88] sm:$0xf]
  %v1908 = vld [vmem:[#allocation3 + $0x90] sm:$0xf]
  %v1909 = vld [vmem:[#allocation3 + $0x98] sm:$0xf]
  %v1911 = vsel %vm1437, %v1889, 0
  %v1914 = vsel %vm137, %v1906, 0
  %v1917 = vsel %vm137, %v1907, 0
  %v1920 = vsel %vm137, %v1908, 0
  %v1923 = vsel %vm137, %v1909, 0
  %1925 = vmatprep.subr.mxu0 %v1891
  %1926 = vmatpush1.msra.mxu0 %v1890
  %1927 = vmatprep.subr.mxu0 %v1895
  %1928 = vmatpush1.msra.mxu0 %v1894
  %1929 = vmatprep.subr.mxu0 %v1899
  %1930 = vmatpush1.msra.mxu0 %v1898
  %1931 = vmatprep.subr.mxu0 %v1903
  %1932 = vmatpush1.msra.mxu0 %v1902
  %1933 = vmatprep.subr.mxu0 %v1917
  %1934 = vmatpush1.msra.mxu0 %v1914
  %1935 = vmatprep.subr.mxu0 0.0
  %1936 = vmatpush1.msra.mxu0 0.0
  %1937 = vmatprep.subr.mxu0 0.0
  %1938 = vmatpush1.msra.mxu0 0.0
  %1939 = vmatprep.subr.mxu0 0.0
  %1940 = vmatpush1.msra.mxu0 0.0
  %1941 = vmatprep.subr.mxu0 0.0
  %1942 = vmatpush1.msra.mxu0 0.0
  %1943 = vmatprep.subr.mxu0 0.0
  %1944 = vmatpush1.msra.mxu0 0.0
  %1945 = vmatprep.subr.mxu0 0.0
  %1946 = vmatpush1.msra.mxu0 0.0
  %1947 = vmatprep.subr.mxu0 0.0
  %1948 = vmatpush1.msra.mxu0 0.0
  %1949 = vmatprep.subr.mxu0 0.0
  %1950 = vmatpush1.msra.mxu0 0.0
  %1951 = vmatprep.subr.mxu0 0.0
  %1952 = vmatpush1.msra.mxu0 0.0
  %1953 = vmatprep.subr.mxu0 0.0
  %1954 = vmatpush1.msra.mxu0 0.0
  %1955 = vmatprep.subr.mxu0 0.0
  %1956 = vmatpush1.msra.mxu0 0.0
  %1957 = vmatprep.subr.mxu0 0.0
  %1958 = vmatpush1.msra.mxu0 0.0
  %1959 = vmatprep.subr.mxu0 0.0
  %1960 = vmatpush1.msra.mxu0 0.0
  %1961 = vmatprep.subr.mxu0 0.0
  %1962 = vmatpush1.msra.mxu0 0.0
  %1963 = vmatprep.subr.mxu0 0.0
  %1964 = vmatpush1.msra.mxu0 0.0
  %1965 = vmatprep.subr.mxu0 0.0
  %1966 = vmatpush1.msra.mxu0 0.0
  %1967 = vmatprep.subr.mxu0 0.0
  %1968 = vmatpush1.msra.mxu0 0.0
  %1969 = vmatprep.subr.mxu0 0.0
  %1970 = vmatpush1.msra.mxu0 0.0
  %1971 = vmatprep.subr.mxu0 0.0
  %1972 = vmatpush1.msra.mxu0 0.0
  %1973 = vmatprep.subr.mxu0 0.0
  %1974 = vmatpush1.msra.mxu0 0.0
  %1975 = vmatprep.subr.mxu0 0.0
  %1976 = vmatpush1.msra.mxu0 0.0
  %1977 = vmatprep.subr.mxu0 0.0
  %1978 = vmatpush1.msra.mxu0 0.0
  %1979 = vmatprep.subr.mxu0 0.0
  %1980 = vmatpush1.msra.mxu0 0.0
  %1981 = vmatprep.subr.mxu0 0.0
  %1982 = vmatpush1.msra.mxu0 0.0
  %1983 = vmatprep.subr.mxu0 0.0
  %1984 = vmatpush1.msra.mxu0 0.0
  %1985 = vmatprep.subr.mxu0 0.0
  %1986 = vmatpush1.msra.mxu0 0.0
  %1987 = vmatprep.subr.mxu0 0.0
  %1988 = vmatpush1.msra.mxu0 0.0
  %1989 = vmatprep.mubr.f32.mxu0 0.0
  %1990 = vmatmul.mubr.f32.gmra.mrb[0].mxu0 %v1911
  %v1991 = vpop.f32.mrb[0].mxu0
  %v1992 = vadd.f32 0.0, %v1991
  %v1993 = vpop.f32.mrb[0].mxu0
  %v1994 = vadd.f32 0.0, %v1993
  %1995 = vdwg.mxu0
  %1996 = vmatprep.subr.mxu0 %v1893
  %1997 = vmatpush1.msra.mxu0 %v1892
  %1998 = vmatprep.subr.mxu0 %v1897
  %1999 = vmatpush1.msra.mxu0 %v1896
  %2000 = vmatprep.subr.mxu0 %v1901
  %2001 = vmatpush1.msra.mxu0 %v1900
  %2002 = vmatprep.subr.mxu0 %v1905
  %2003 = vmatpush1.msra.mxu0 %v1904
  %2004 = vmatprep.subr.mxu0 %v1923
  %2005 = vmatpush1.msra.mxu0 %v1920
  %2006 = vmatprep.subr.mxu0 0.0
  %2007 = vmatpush1.msra.mxu0 0.0
  %2008 = vmatprep.subr.mxu0 0.0
  %2009 = vmatpush1.msra.mxu0 0.0
  %2010 = vmatprep.subr.mxu0 0.0
  %2011 = vmatpush1.msra.mxu0 0.0
  %2012 = vmatprep.subr.mxu0 0.0
  %2013 = vmatpush1.msra.mxu0 0.0
  %2014 = vmatprep.subr.mxu0 0.0
  %2015 = vmatpush1.msra.mxu0 0.0
  %2016 = vmatprep.subr.mxu0 0.0
  %2017 = vmatpush1.msra.mxu0 0.0
  %2018 = vmatprep.subr.mxu0 0.0
  %2019 = vmatpush1.msra.mxu0 0.0
  %2020 = vmatprep.subr.mxu0 0.0
  %2021 = vmatpush1.msra.mxu0 0.0
  %2022 = vmatprep.subr.mxu0 0.0
  %2023 = vmatpush1.msra.mxu0 0.0
  %2024 = vmatprep.subr.mxu0 0.0
  %2025 = vmatpush1.msra.mxu0 0.0
  %2026 = vmatprep.subr.mxu0 0.0
  %2027 = vmatpush1.msra.mxu0 0.0
  %2028 = vmatprep.subr.mxu0 0.0
  %2029 = vmatpush1.msra.mxu0 0.0
  %2030 = vmatprep.subr.mxu0 0.0
  %2031 = vmatpush1.msra.mxu0 0.0
  %2032 = vmatprep.subr.mxu0 0.0
  %2033 = vmatpush1.msra.mxu0 0.0
  %2034 = vmatprep.subr.mxu0 0.0
  %2035 = vmatpush1.msra.mxu0 0.0
  %2036 = vmatprep.subr.mxu0 0.0
  %2037 = vmatpush1.msra.mxu0 0.0
  %2038 = vmatprep.subr.mxu0 0.0
  %2039 = vmatpush1.msra.mxu0 0.0
  %2040 = vmatprep.subr.mxu0 0.0
  %2041 = vmatpush1.msra.mxu0 0.0
  %2042 = vmatprep.subr.mxu0 0.0
  %2043 = vmatpush1.msra.mxu0 0.0
  %2044 = vmatprep.subr.mxu0 0.0
  %2045 = vmatpush1.msra.mxu0 0.0
  %2046 = vmatprep.subr.mxu0 0.0
  %2047 = vmatpush1.msra.mxu0 0.0
  %2048 = vmatprep.subr.mxu0 0.0
  %2049 = vmatpush1.msra.mxu0 0.0
  %2050 = vmatprep.subr.mxu0 0.0
  %2051 = vmatpush1.msra.mxu0 0.0
  %2052 = vmatprep.subr.mxu0 0.0
  %2053 = vmatpush1.msra.mxu0 0.0
  %2054 = vmatprep.subr.mxu0 0.0
  %2055 = vmatpush1.msra.mxu0 0.0
  %2056 = vmatprep.subr.mxu0 0.0
  %2057 = vmatpush1.msra.mxu0 0.0
  %2058 = vmatprep.subr.mxu0 0.0
  %2059 = vmatpush1.msra.mxu0 0.0
  %2060 = vmatprep.mubr.f32.mxu0 0.0
  %2061 = vmatmul.mubr.f32.gmra.mrb[0].mxu0 %v1911
  %v2062 = vpop.f32.mrb[0].mxu0
  %v2063 = vadd.f32 0.0, %v2062
  %v2064 = vpop.f32.mrb[0].mxu0
  %v2065 = vadd.f32 0.0, %v2064
  %2066 = vdwg.mxu0
  %v2067 = vsel %vm137, %v1992, 0.0
  %v2068 = vsel %vm137, %v1994, 0.0
  %v2069 = vadd.f32 %v2067, %v2068
  %v2070 = vsel %vm137, %v2063, 0.0
  %v2071 = vadd.f32 %v2069, %v2070
  %v2072 = vsel %vm137, %v2065, 0.0
  %v2073 = vadd.f32 %v2071, %v2072
  %2074 = vadd.xlane.f32.xlu0 %v2073
  %v2075 = vpop.xlane.xlu0 %2074
  %v2076 = vmul.f32 %v2075, %v1010
  %v2077 = vsub.f32 %v1992, %v2076
  %v2078 = vsub.f32 %v1994, %v2076
  %v2079 = vsub.f32 %v2063, %v2076
  %v2080 = vsub.f32 %v2065, %v2076
  %v2081 = vmul.f32 %v2077, %v2077
  %v2082 = vmul.f32 %v2078, %v2078
  %v2083 = vmul.f32 %v2079, %v2079
  %v2084 = vmul.f32 %v2080, %v2080
  %v2085 = vsel %vm137, %v2081, 0.0
  %v2086 = vsel %vm137, %v2082, 0.0
  %v2087 = vadd.f32 %v2085, %v2086
  %v2088 = vsel %vm137, %v2083, 0.0
  %v2089 = vadd.f32 %v2087, %v2088
  %v2090 = vsel %vm137, %v2084, 0.0
  %v2091 = vadd.f32 %v2089, %v2090
  %2092 = vadd.xlane.f32.xlu0 %v2091
  %v2093 = vpop.xlane.xlu0 %2092
  %v2094 = vmul.f32 %v2093, %v1010
  %v2095 = vadd.f32 %v2094, 1e-05
  %v2096 = vrsqrt.pop %v2095
  %v2097 = vmul.f32 %v2077, %v2096
  %v2098 = vmul.f32 %v2078, %v2096
  %v2099 = vmul.f32 %v2079, %v2096
  %v2100 = vmul.f32 %v2080, %v2096
  %v2101 = vld [vmem:[%s10] sm:$0xf]
  %2103 = vset.pattern.permute.xlu0 0
  %2104 = vperm.xlu0 %2103, %v2101
  %v2105 = vpop.permute.xlu0 %2104
  %v2107 = vmul.f32 %v2097, %v2105
  %v2108 = vmul.f32 %v2098, %v2105
  %v2109 = vmul.f32 %v2099, %v2105
  %v2110 = vmul.f32 %v2100, %v2105
  %v2111 = vld [vmem:[%s11] sm:$0xf]
  %2113 = vset.pattern.permute.xlu0 0
  %2114 = vperm.xlu0 %2113, %v2111
  %v2115 = vpop.permute.xlu0 %2114
  %v2117 = vadd.f32 %v2107, %v2115
  %v2118 = vadd.f32 %v2108, %v2115
  %v2119 = vadd.f32 %v2109, %v2115
  %v2120 = vadd.f32 %v2110, %v2115
  %v2121 = vadd.f32 %v2117, %v1056
  %v2122 = vadd.f32 %v2118, %v1057
  %v2123 = vadd.f32 %v2119, %v1058
  %v2124 = vadd.f32 %v2120, %v1059
  %v2125 = vmax.f32 %v2121, 0.0
  %v2126 = vmax.f32 %v2122, 0.0
  %v2127 = vmax.f32 %v2123, 0.0
  %v2128 = vmax.f32 %v2124, 0.0
  %v2133 = vcombine.low %v2125, %v2126
  %v2134 = vcombine.low %v2127, %v2128
  %2137 = vst [vmem:[%s12] sm:$0xff] %v2133
  %2138 = vst [vmem:[%s12 + $0x8] sm:$0xff] %v2134
  // Predicated region
  $region50: #{unet_up_block_forward.3} parent=0 // pred_check
    _
  $region51: #{unet_up_block_forward.3} parent=0 // pred_check_branch
    %2140 = sbr.rel (0) target = $region53
  $region52: #{unet_up_block_forward.3} parent=0 // pred_region
    _
  $region53: #{unet_up_block_forward.3} parent=0 // pred_fallthru
    _
  // Predicated region
  $region54: #{unet_up_block_forward.3} parent=0 // pred_check
    _
  $region55: #{unet_up_block_forward.3} parent=0 // pred_check_branch
    %2142 = sbr.rel (0) target = $region57
  $region56: #{unet_up_block_forward.3} parent=0 // pred_region
    _
  $region57: #{unet_up_block_forward.3} parent=0 // pred_fallthru
    _

</llo_original>
